<compile_context>
chip_gen: v7x
topology: tpu7x:2x2x1
jax: 0.10.0
libtpu: 0.0.40
codegen_flags: <defaults>
</compile_context>

<pallas_src>
import functools

import jax
import jax.numpy as jnp
from jax import lax
from jax.experimental import pallas as pl
from jax.experimental.pallas import tpu as pltpu


def _round_up(n: int, m: int) -> int:
    return ((n + m - 1) // m) * m


def _vmem_limit_bytes() -> int:
    """Generation-dependent VMEM budget (~3/4 of physical, clamped to [32, 96] MiB)."""
    mib = 1024 * 1024
    try:
        phys = int(pltpu.get_tpu_info().vmem_capacity_bytes)
    except Exception:          # fall back to a v7x-safe budget
        phys = 64 * mib
    return int(max(32 * mib, min((phys * 3) // 4, 96 * mib)))


def _charrnn_block_kernel(xw_ref, h0_ref, wh_ref, scale_ref, wp_ref, bp_ref,
                          out_ref, h_state, *, block_t: int, half: int):
    """block_t recurrent steps per grid iteration.

    Grid = (batch_blocks, time_blocks): time axis is serial ("arbitrary"), batch axis is
    independent ("parallel" — used by v7x's two TensorCores).

    xw_ref    : (bt, bb, H_pad) f32  -- precomputed x_t @ W_i2h + (b_i2h + b_h2h)
    h0_ref    : (bb, H_pad)     f32  -- initial hidden state for this batch block
    wh_ref    : (H_pad, H_pad)  pdt  -- recurrent weight (VMEM resident)
    scale_ref : (1, H_pad)      f32  -- (1 + scale) row
    wp_ref    : (half, H_pad)   pdt  -- XOR projection weight, 0.5 pre-folded
    bp_ref    : (1, H_pad)      f32  -- XOR projection bias
    out_ref   : (bt, bb, H_pad) out dtype
    h_state   : (bb, H_pad) f32 VMEM scratch -- hidden state carried across time blocks
    """
    ti = pl.program_id(1)

    @pl.when(ti == 0)
    def _():
        h_state[...] = h0_ref[...]

    # Hoist resident-operand reads out of the unrolled step loop.
    wh = wh_ref[...]
    wp = wp_ref[...]
    scale_row = scale_ref[...]
    bp = bp_ref[...]
    aligned = (half % 128) == 0

    def step(s, h):
        # Serial recurrent matmul only (i2h was hoisted out): K = H_pad, f32 accumulation.
        hc = xw_ref[s] + jnp.dot(h.astype(wh.dtype), wh,
                                 preferred_element_type=jnp.float32)
        # SelfScalableTanh: tanh(x) + scale*tanh(x) == (1 + scale) * tanh(x)
        h_new = jnp.tanh(hc) * scale_row
        # DifferentiableXORLayer (0.5 folded into wp on the host).
        if aligned:
            a = jax.nn.sigmoid(h_new[:, :half])             # lane-aligned slices,
            b = jax.nn.sigmoid(h_new[:, half:2 * half])     # sigmoid only on real lanes
        else:
            sig = jax.nn.sigmoid(h_new)
            a = sig[:, :half]
            b = sig[:, half:2 * half]
        xor = a + b - 2.0 * (a * b)
        proj = jnp.dot(xor.astype(wp.dtype), wp,
                       preferred_element_type=jnp.float32) + bp
        h_out = h_new + proj                                # padded lanes stay exactly 0
        out_ref[s] = h_out.astype(out_ref.dtype)
        return h_out                                        # carried state stays f32

    h_state[...] = lax.fori_loop(0, block_t, step, h_state[...], unroll=True)


def init_params(key, input_size, hidden_size):
    """Logical parameters, pre-transposed so forward is x @ W (uniform fan-in init)."""
    assert hidden_size % 2 == 0, "hidden_size must be even for differentiable XOR."
    ks = jax.random.split(key, 3)

    def linear(k, fan_in, fan_out):
        kw, kb = jax.random.split(k)
        bound = 1.0 / float(fan_in) ** 0.5
        w = jax.random.uniform(kw, (fan_in, fan_out), jnp.float32, -bound, bound)
        b = jax.random.uniform(kb, (1, fan_out), jnp.float32, -bound, bound)
        return w, b

    wi, bi = linear(ks[0], input_size, hidden_size)
    wh, bh = linear(ks[1], hidden_size, hidden_size)
    wp, bp = linear(ks[2], hidden_size // 2, hidden_size)
    scale = jnp.asarray(0.1, jnp.float32)      # SelfScalableTanh init_scale
    return dict(wi=wi, bi=bi, wh=wh, bh=bh, wp=wp, bp=bp, scale=scale)


def pack_params(p, input_size, hidden_size, param_dtype=jnp.bfloat16):
    """Kernel-layout parameters, zero-padded to lane-dense multiples of 128.

    bf16 is the default operand dtype (native MXU width, halves resident weight VMEM);
    pass jnp.float32 for an exactness-check path. Accumulation is always f32.
    """
    h_pad = _round_up(hidden_size, 128)
    half = hidden_size // 2
    pdt = jnp.dtype(param_dtype)

    wh_p = jnp.zeros((h_pad, h_pad), jnp.float32).at[:hidden_size, :hidden_size].set(p["wh"])
    scale_row = jnp.full((1, h_pad), 1.0 + p["scale"], jnp.float32)
    # Fold the XOR's 0.5 into the projection weight (saves one full-width VPU mul/step).
    wp_p = jnp.zeros((half, h_pad), jnp.float32).at[:, :hidden_size].set(0.5 * p["wp"])
    bp_p = jnp.zeros((1, h_pad), jnp.float32).at[:, :hidden_size].set(p["bp"])

    return dict(
        wi=p["wi"].astype(pdt),                         # hoisted i2h GEMM operand
        b_sum=(p["bi"] + p["bh"]).astype(jnp.float32),  # folded into the precompute
        wh=wh_p.astype(pdt),
        scale_row=scale_row,
        wp=wp_p.astype(pdt),
        bp=bp_p,
        h_pad=h_pad, half=half,
        input_size=input_size, hidden_size=hidden_size,
        param_dtype=pdt,
    )


def char_rnn_sequence(xs, h0, packed, *, block_t=8, block_b=None, out_dtype=None):
    """Run T CharRNNCell steps: hoisted i2h GEMM + one time-fused pallas_call.

    xs: (T, B, input_size), h0: (B, hidden_size) -> (T, B, hidden_size).
    """
    T, B, in_size = xs.shape
    h_size = h0.shape[-1]
    assert in_size == packed["input_size"] and h_size == packed["hidden_size"]

    h_pad, half = packed["h_pad"], packed["half"]
    pdt = packed["param_dtype"]
    out_dtype = pdt if out_dtype is None else jnp.dtype(out_dtype)

    bt = max(1, min(block_t, T))
    tp = _round_up(T, bt)                          # pad time to a multiple of the block
    bb = B if block_b is None else block_b
    assert B % bb == 0 and (bb == B or bb % 8 == 0)

    # 1) Hoisted input projection: one GEMM with M = T*B (fills the MXU), f32 output.
    #    Plain XLA is fine here; only the serial recurrence needs a custom kernel.
    xw = jnp.dot(xs.reshape(T * B, in_size).astype(pdt), packed["wi"],
                 preferred_element_type=jnp.float32,
                 precision=jax.lax.Precision.HIGHEST)
    xw = xw.reshape(T, B, h_size) + packed["b_sum"]

    # 2) Zero-pad to the lane-dense kernel layout.
    xw_p = jnp.zeros((tp, B, h_pad), jnp.float32).at[:T, :, :h_size].set(xw)
    h0_p = jnp.zeros((B, h_pad), jnp.float32).at[:, :h_size].set(h0.astype(jnp.float32))

    kernel = functools.partial(_charrnn_block_kernel, block_t=bt, half=half)
    operands = (xw_p, h0_p, packed["wh"], packed["scale_row"], packed["wp"], packed["bp"])

    flops = tp * B * (2 * h_pad * h_pad + 2 * half * h_pad + 12 * h_pad)
    bytes_accessed = sum(int(a.size) * a.dtype.itemsize for a in operands) \
        + tp * B * h_pad * jnp.dtype(out_dtype).itemsize
    cost = pl.CostEstimate(flops=int(flops),
                           transcendentals=int(2 * tp * B * h_pad),
                           bytes_accessed=int(bytes_accessed))

    hs_pad = pl.pallas_call(
        kernel,
        out_shape=jax.ShapeDtypeStruct((tp, B, h_pad), out_dtype),
        grid_spec=pltpu.PrefetchScalarGridSpec(
            num_scalar_prefetch=0,
            grid=(B // bb, tp // bt),
            in_specs=[
                pl.BlockSpec((bt, bb, h_pad), lambda bi, ti: (ti, bi, 0)),  # xW_t block
                pl.BlockSpec((bb, h_pad), lambda bi, ti: (bi, 0)),          # h0
                pl.BlockSpec((h_pad, h_pad), lambda bi, ti: (0, 0)),        # W_h2h
                pl.BlockSpec((1, h_pad), lambda bi, ti: (0, 0)),            # (1 + scale)
                pl.BlockSpec((half, h_pad), lambda bi, ti: (0, 0)),         # 0.5 * W_proj
                pl.BlockSpec((1, h_pad), lambda bi, ti: (0, 0)),            # b_proj
            ],
            out_specs=pl.BlockSpec((bt, bb, h_pad), lambda bi, ti: (ti, bi, 0)),
            scratch_shapes=[pltpu.VMEM((bb, h_pad), jnp.float32)],          # carried h
        ),
        compiler_params=pltpu.CompilerParams(
            dimension_semantics=("parallel", "arbitrary"),  # batch parallel, time serial
            vmem_limit_bytes=_vmem_limit_bytes(),
        ),
        cost_estimate=cost,
    )(*operands)

    return hs_pad[:T, :, :h_size]


def char_rnn_cell(x, h_prev, packed):
    """Single CharRNNCell step (exactly the PyTorch module's forward)."""
    return char_rnn_sequence(x[None], h_prev, packed, block_t=1)[0]


# ----------------------------- pure-JAX reference -----------------------------

def char_rnn_cell_ref(x, h_prev, p):
    hp = jax.lax.Precision.HIGHEST
    hc = (jnp.dot(x, p["wi"], precision=hp) + p["bi"]
          + jnp.dot(h_prev, p["wh"], precision=hp) + p["bh"])
    th = jnp.tanh(hc)
    h_new = th + p["scale"] * th
    d = h_new.shape[-1] // 2
    a = jax.nn.sigmoid(h_new[:, :d])
    b = jax.nn.sigmoid(h_new[:, d:])
    xor = 0.5 * (a + b - 2.0 * a * b)
    return h_new + (jnp.dot(xor, p["wp"], precision=hp) + p["bp"])


def char_rnn_sequence_ref(xs, h0, p):
    h = h0
    outs = []
    for t in range(xs.shape[0]):
        h = char_rnn_cell_ref(xs[t], h, p)
        outs.append(h)
    return jnp.stack(outs)


if __name__ == "__main__":
    key = jax.random.PRNGKey(0)

    def run_case(kcase, T, B, INPUT, HIDDEN, block_t):
        kx, kh, kp = jax.random.split(kcase, 3)
        xs = jax.random.normal(kx, (T, B, INPUT), jnp.float32)
        h0 = jax.random.normal(kh, (B, HIDDEN), jnp.float32)
        params = init_params(kp, INPUT, HIDDEN)
        ref = char_rnn_sequence_ref(xs, h0, params)

        # --- f32 weights: exactness check (tolerance covers MXU multi-pass f32) ---
        packed_f32 = pack_params(params, INPUT, HIDDEN, jnp.float32)
        hs = jax.block_until_ready(char_rnn_sequence(xs, h0, packed_f32, block_t=block_t))
        assert hs.shape == (T, B, HIDDEN)
        err = float(jnp.max(jnp.abs(hs - ref)))
        assert jnp.allclose(hs, ref, atol=3e-2, rtol=3e-2), f"f32 seq mismatch {err}"

        h1 = jax.block_until_ready(char_rnn_cell(xs[0], h0, packed_f32))
        assert jnp.allclose(h1, ref[0], atol=3e-2, rtol=3e-2), "f32 single-step mismatch"

        # --- bf16 default path (bf16 operands, f32 accumulation & carried state) ---
        packed_bf16 = pack_params(params, INPUT, HIDDEN)           # default bf16
        hs_bf16 = jax.block_until_ready(
            char_rnn_sequence(xs, h0, packed_bf16, block_t=block_t))
        params_rt = dict(params)
        for k_ in ("wi", "wh", "wp"):
            params_rt[k_] = params[k_].astype(jnp.bfloat16).astype(jnp.float32)
        ref_bf16 = char_rnn_sequence_ref(
            xs.astype(jnp.bfloat16).astype(jnp.float32), h0, params_rt)
        err_bf16 = float(jnp.max(jnp.abs(hs_bf16.astype(jnp.float32) - ref_bf16)))
        # Loose sanity bound for the reduced-precision path (f32 path is the exact check).
        assert err_bf16 < 0.2, f"bf16 seq diverged: {err_bf16}"

    ks = jax.random.split(key, 2)
    # Small shapes; T=10 with block_t=8 also exercises the time-padding path.
    run_case(ks[0], T=10, B=8, INPUT=16, HIDDEN=32, block_t=8)
    # hidden % 256 == 0 exercises the lane-aligned XOR half-split / restricted-sigmoid path.
    run_case(ks[1], T=6, B=8, INPUT=32, HIDDEN=256, block_t=4)

    print("KERNEL_OK")
</pallas_src>

<mosaic_0001>
module attributes {stable_mosaic.version = 11 : i64} {
  func.func @_charrnn_block_kernel(%arg0: i32, %arg1: i32, %arg2: memref<8x8x128xf32, #tpu.memory_space<vmem>>, %arg3: memref<8x128xf32, #tpu.memory_space<vmem>>, %arg4: memref<128x128xf32, #tpu.memory_space<vmem>>, %arg5: memref<1x128xf32, #tpu.memory_space<vmem>>, %arg6: memref<16x128xf32, #tpu.memory_space<vmem>>, %arg7: memref<1x128xf32, #tpu.memory_space<vmem>>, %arg8: memref<8x8x128xf32, #tpu.memory_space<vmem>>, %arg9: memref<8x128xf32, #tpu.memory_space<vmem>>) attributes {dimension_semantics = [#tpu.dimension_semantics<parallel>, #tpu.dimension_semantics<arbitrary>], iteration_bounds = array<i64: 1, 2>, scalar_prefetch = 0 : i64, scratch_operands = 1 : i64, tpu.core_type = #tpu.core_type<tc>, window_params = [{transform_indices = @transform_0, window_bounds = array<i64: 8, 8, 128>}, {transform_indices = @transform_1, window_bounds = array<i64: 8, 128>}, {pipeline_mode = #tpu.pipeline_mode<synchronous>, transform_indices = @transform_2, window_bounds = array<i64: 128, 128>}, {pipeline_mode = #tpu.pipeline_mode<synchronous>, transform_indices = @transform_3, window_bounds = array<i64: 1, 128>}, {pipeline_mode = #tpu.pipeline_mode<synchronous>, transform_indices = @transform_4, window_bounds = array<i64: 16, 128>}, {pipeline_mode = #tpu.pipeline_mode<synchronous>, transform_indices = @transform_5, window_bounds = array<i64: 1, 128>}, {transform_indices = @transform_6, window_bounds = array<i64: 8, 8, 128>}]} {
    %c0_i32 = arith.constant 0 : i32
    %0 = arith.cmpi eq, %arg1, %c0_i32 : i32
    %1 = arith.extui %0 : i1 to i32
    %c0_i32_0 = arith.constant 0 : i32
    %2 = arith.cmpi ne, %1, %c0_i32_0 : i32
    scf.if %2 {
      %c0_76 = arith.constant 0 : index
      %c0_77 = arith.constant 0 : index
      %233 = vector.load %arg3[%c0_76, %c0_77] : memref<8x128xf32, #tpu.memory_space<vmem>>, vector<8x128xf32>
      %c0_78 = arith.constant 0 : index
      %c0_79 = arith.constant 0 : index
      %234 = vector.load %arg9[%c0_78, %c0_79] : memref<8x128xf32, #tpu.memory_space<vmem>>, vector<8x128xf32>
      tpu.vector_store %arg9[%c0_78, %c0_79], %233 {strides = array<i32>} : memref<8x128xf32, #tpu.memory_space<vmem>>, vector<8x128xf32>,
    } else {
    }
    %c0 = arith.constant 0 : index
    %c0_1 = arith.constant 0 : index
    %3 = vector.load %arg4[%c0, %c0_1] : memref<128x128xf32, #tpu.memory_space<vmem>>, vector<128x128xf32>
    %c0_2 = arith.constant 0 : index
    %c0_3 = arith.constant 0 : index
    %4 = vector.load %arg6[%c0_2, %c0_3] : memref<16x128xf32, #tpu.memory_space<vmem>>, vector<16x128xf32>
    %c0_4 = arith.constant 0 : index
    %c0_5 = arith.constant 0 : index
    %5 = vector.load %arg5[%c0_4, %c0_5] : memref<1x128xf32, #tpu.memory_space<vmem>>, vector<1x128xf32>
    %c0_6 = arith.constant 0 : index
    %c0_7 = arith.constant 0 : index
    %6 = vector.load %arg7[%c0_6, %c0_7] : memref<1x128xf32, #tpu.memory_space<vmem>>, vector<1x128xf32>
    %c0_8 = arith.constant 0 : index
    %c0_9 = arith.constant 0 : index
    %7 = vector.load %arg9[%c0_8, %c0_9] : memref<8x128xf32, #tpu.memory_space<vmem>>, vector<8x128xf32>
    %c0_i32_10 = arith.constant 0 : i32
    %8 = arith.index_cast %c0_i32_10 : i32 to index
    %c0_11 = arith.constant 0 : index
    %c0_12 = arith.constant 0 : index
    %9 = vector.load %arg2[%8, %c0_11, %c0_12] : memref<8x8x128xf32, #tpu.memory_space<vmem>>, vector<1x8x128xf32>
    %10 = vector.shape_cast %9 : vector<1x8x128xf32> to vector<8x128xf32>
    %cst = arith.constant dense<0.000000e+00> : vector<8x128xf32>
    %11 = tpu.matmul %7, %3, %cst {dimension_numbers = #tpu.dot_dimension_numbers<[1], [0], [0], [1], [0, 0, 1, 1], [], []>} : vector<8x128xf32>, vector<128x128xf32>, vector<8x128xf32> -> vector<8x128xf32>
    %12 = arith.addf %10, %11 : vector<8x128xf32>
    %13 = math.tanh %12 : vector<8x128xf32>
    %14 = vector.broadcast %5 : vector<1x128xf32> to vector<8x128xf32>
    %15 = arith.mulf %13, %14 : vector<8x128xf32>
    %16 = arith.negf %15 : vector<8x128xf32>
    %17 = math.exp %16 : vector<8x128xf32>
    %cst_13 = arith.constant 1.000000e+00 : f32
    %18 = vector.broadcast %cst_13 : f32 to vector<8x128xf32>
    %19 = arith.addf %18, %17 : vector<8x128xf32>
    %20 = arith.divf %18, %19 : vector<8x128xf32>
    %21 = vector.extract_strided_slice %20 {offsets = [0, 0], sizes = [8, 16], strides = [1, 1]} : vector<8x128xf32> to vector<8x16xf32>
    %22 = vector.extract_strided_slice %20 {offsets = [0, 16], sizes = [8, 16], strides = [1, 1]} : vector<8x128xf32> to vector<8x16xf32>
    %23 = arith.addf %21, %22 : vector<8x16xf32>
    %24 = arith.mulf %21, %22 : vector<8x16xf32>
    %cst_14 = arith.constant 2.000000e+00 : f32
    %25 = vector.broadcast %cst_14 : f32 to vector<8x16xf32>
    %26 = arith.mulf %25, %24 : vector<8x16xf32>
    %27 = arith.subf %23, %26 : vector<8x16xf32>
    %cst_15 = arith.constant dense<0.000000e+00> : vector<8x128xf32>
    %28 = tpu.matmul %27, %4, %cst_15 {dimension_numbers = #tpu.dot_dimension_numbers<[1], [0], [0], [1], [0, 0, 1, 1], [], []>} : vector<8x16xf32>, vector<16x128xf32>, vector<8x128xf32> -> vector<8x128xf32>
    %29 = vector.broadcast %6 : vector<1x128xf32> to vector<8x128xf32>
    %30 = arith.addf %28, %29 : vector<8x128xf32>
    %31 = arith.addf %15, %30 : vector<8x128xf32>
    %32 = arith.index_cast %c0_i32_10 : i32 to index
    %c0_16 = arith.constant 0 : index
    %c0_17 = arith.constant 0 : index
    %33 = vector.load %arg8[%32, %c0_16, %c0_17] : memref<8x8x128xf32, #tpu.memory_space<vmem>>, vector<1x8x128xf32>
    %34 = vector.shape_cast %33 : vector<1x8x128xf32> to vector<8x128xf32>
    %35 = vector.shape_cast %31 : vector<8x128xf32> to vector<1x8x128xf32>
    tpu.vector_store %arg8[%32, %c0_16, %c0_17], %35 {strides = array<i32>} : memref<8x8x128xf32, #tpu.memory_space<vmem>>, vector<1x8x128xf32>,
    %c1_i32 = arith.constant 1 : i32
    %36 = arith.index_cast %c1_i32 : i32 to index
    %c0_18 = arith.constant 0 : index
    %c0_19 = arith.constant 0 : index
    %37 = vector.load %arg2[%36, %c0_18, %c0_19] : memref<8x8x128xf32, #tpu.memory_space<vmem>>, vector<1x8x128xf32>
    %38 = vector.shape_cast %37 : vector<1x8x128xf32> to vector<8x128xf32>
    %cst_20 = arith.constant dense<0.000000e+00> : vector<8x128xf32>
    %39 = tpu.matmul %31, %3, %cst_20 {dimension_numbers = #tpu.dot_dimension_numbers<[1], [0], [0], [1], [0, 0, 1, 1], [], []>} : vector<8x128xf32>, vector<128x128xf32>, vector<8x128xf32> -> vector<8x128xf32>
    %40 = arith.addf %38, %39 : vector<8x128xf32>
    %41 = math.tanh %40 : vector<8x128xf32>
    %42 = vector.broadcast %5 : vector<1x128xf32> to vector<8x128xf32>
    %43 = arith.mulf %41, %42 : vector<8x128xf32>
    %44 = arith.negf %43 : vector<8x128xf32>
    %45 = math.exp %44 : vector<8x128xf32>
    %cst_21 = arith.constant 1.000000e+00 : f32
    %46 = vector.broadcast %cst_21 : f32 to vector<8x128xf32>
    %47 = arith.addf %46, %45 : vector<8x128xf32>
    %48 = arith.divf %46, %47 : vector<8x128xf32>
    %49 = vector.extract_strided_slice %48 {offsets = [0, 0], sizes = [8, 16], strides = [1, 1]} : vector<8x128xf32> to vector<8x16xf32>
    %50 = vector.extract_strided_slice %48 {offsets = [0, 16], sizes = [8, 16], strides = [1, 1]} : vector<8x128xf32> to vector<8x16xf32>
    %51 = arith.addf %49, %50 : vector<8x16xf32>
    %52 = arith.mulf %49, %50 : vector<8x16xf32>
    %cst_22 = arith.constant 2.000000e+00 : f32
    %53 = vector.broadcast %cst_22 : f32 to vector<8x16xf32>
    %54 = arith.mulf %53, %52 : vector<8x16xf32>
    %55 = arith.subf %51, %54 : vector<8x16xf32>
    %cst_23 = arith.constant dense<0.000000e+00> : vector<8x128xf32>
    %56 = tpu.matmul %55, %4, %cst_23 {dimension_numbers = #tpu.dot_dimension_numbers<[1], [0], [0], [1], [0, 0, 1, 1], [], []>} : vector<8x16xf32>, vector<16x128xf32>, vector<8x128xf32> -> vector<8x128xf32>
    %57 = vector.broadcast %6 : vector<1x128xf32> to vector<8x128xf32>
    %58 = arith.addf %56, %57 : vector<8x128xf32>
    %59 = arith.addf %43, %58 : vector<8x128xf32>
    %60 = arith.index_cast %c1_i32 : i32 to index
    %c0_24 = arith.constant 0 : index
    %c0_25 = arith.constant 0 : index
    %61 = vector.load %arg8[%60, %c0_24, %c0_25] : memref<8x8x128xf32, #tpu.memory_space<vmem>>, vector<1x8x128xf32>
    %62 = vector.shape_cast %61 : vector<1x8x128xf32> to vector<8x128xf32>
    %63 = vector.shape_cast %59 : vector<8x128xf32> to vector<1x8x128xf32>
    tpu.vector_store %arg8[%60, %c0_24, %c0_25], %63 {strides = array<i32>} : memref<8x8x128xf32, #tpu.memory_space<vmem>>, vector<1x8x128xf32>,
    %c2_i32 = arith.constant 2 : i32
    %64 = arith.index_cast %c2_i32 : i32 to index
    %c0_26 = arith.constant 0 : index
    %c0_27 = arith.constant 0 : index
    %65 = vector.load %arg2[%64, %c0_26, %c0_27] : memref<8x8x128xf32, #tpu.memory_space<vmem>>, vector<1x8x128xf32>
    %66 = vector.shape_cast %65 : vector<1x8x128xf32> to vector<8x128xf32>
    %cst_28 = arith.constant dense<0.000000e+00> : vector<8x128xf32>
    %67 = tpu.matmul %59, %3, %cst_28 {dimension_numbers = #tpu.dot_dimension_numbers<[1], [0], [0], [1], [0, 0, 1, 1], [], []>} : vector<8x128xf32>, vector<128x128xf32>, vector<8x128xf32> -> vector<8x128xf32>
    %68 = arith.addf %66, %67 : vector<8x128xf32>
    %69 = math.tanh %68 : vector<8x128xf32>
    %70 = vector.broadcast %5 : vector<1x128xf32> to vector<8x128xf32>
    %71 = arith.mulf %69, %70 : vector<8x128xf32>
    %72 = arith.negf %71 : vector<8x128xf32>
    %73 = math.exp %72 : vector<8x128xf32>
    %cst_29 = arith.constant 1.000000e+00 : f32
    %74 = vector.broadcast %cst_29 : f32 to vector<8x128xf32>
    %75 = arith.addf %74, %73 : vector<8x128xf32>
    %76 = arith.divf %74, %75 : vector<8x128xf32>
    %77 = vector.extract_strided_slice %76 {offsets = [0, 0], sizes = [8, 16], strides = [1, 1]} : vector<8x128xf32> to vector<8x16xf32>
    %78 = vector.extract_strided_slice %76 {offsets = [0, 16], sizes = [8, 16], strides = [1, 1]} : vector<8x128xf32> to vector<8x16xf32>
    %79 = arith.addf %77, %78 : vector<8x16xf32>
    %80 = arith.mulf %77, %78 : vector<8x16xf32>
    %cst_30 = arith.constant 2.000000e+00 : f32
    %81 = vector.broadcast %cst_30 : f32 to vector<8x16xf32>
    %82 = arith.mulf %81, %80 : vector<8x16xf32>
    %83 = arith.subf %79, %82 : vector<8x16xf32>
    %cst_31 = arith.constant dense<0.000000e+00> : vector<8x128xf32>
    %84 = tpu.matmul %83, %4, %cst_31 {dimension_numbers = #tpu.dot_dimension_numbers<[1], [0], [0], [1], [0, 0, 1, 1], [], []>} : vector<8x16xf32>, vector<16x128xf32>, vector<8x128xf32> -> vector<8x128xf32>
    %85 = vector.broadcast %6 : vector<1x128xf32> to vector<8x128xf32>
    %86 = arith.addf %84, %85 : vector<8x128xf32>
    %87 = arith.addf %71, %86 : vector<8x128xf32>
    %88 = arith.index_cast %c2_i32 : i32 to index
    %c0_32 = arith.constant 0 : index
    %c0_33 = arith.constant 0 : index
    %89 = vector.load %arg8[%88, %c0_32, %c0_33] : memref<8x8x128xf32, #tpu.memory_space<vmem>>, vector<1x8x128xf32>
    %90 = vector.shape_cast %89 : vector<1x8x128xf32> to vector<8x128xf32>
    %91 = vector.shape_cast %87 : vector<8x128xf32> to vector<1x8x128xf32>
    tpu.vector_store %arg8[%88, %c0_32, %c0_33], %91 {strides = array<i32>} : memref<8x8x128xf32, #tpu.memory_space<vmem>>, vector<1x8x128xf32>,
    %c3_i32 = arith.constant 3 : i32
    %92 = arith.index_cast %c3_i32 : i32 to index
    %c0_34 = arith.constant 0 : index
    %c0_35 = arith.constant 0 : index
    %93 = vector.load %arg2[%92, %c0_34, %c0_35] : memref<8x8x128xf32, #tpu.memory_space<vmem>>, vector<1x8x128xf32>
    %94 = vector.shape_cast %93 : vector<1x8x128xf32> to vector<8x128xf32>
    %cst_36 = arith.constant dense<0.000000e+00> : vector<8x128xf32>
    %95 = tpu.matmul %87, %3, %cst_36 {dimension_numbers = #tpu.dot_dimension_numbers<[1], [0], [0], [1], [0, 0, 1, 1], [], []>} : vector<8x128xf32>, vector<128x128xf32>, vector<8x128xf32> -> vector<8x128xf32>
    %96 = arith.addf %94, %95 : vector<8x128xf32>
    %97 = math.tanh %96 : vector<8x128xf32>
    %98 = vector.broadcast %5 : vector<1x128xf32> to vector<8x128xf32>
    %99 = arith.mulf %97, %98 : vector<8x128xf32>
    %100 = arith.negf %99 : vector<8x128xf32>
    %101 = math.exp %100 : vector<8x128xf32>
    %cst_37 = arith.constant 1.000000e+00 : f32
    %102 = vector.broadcast %cst_37 : f32 to vector<8x128xf32>
    %103 = arith.addf %102, %101 : vector<8x128xf32>
    %104 = arith.divf %102, %103 : vector<8x128xf32>
    %105 = vector.extract_strided_slice %104 {offsets = [0, 0], sizes = [8, 16], strides = [1, 1]} : vector<8x128xf32> to vector<8x16xf32>
    %106 = vector.extract_strided_slice %104 {offsets = [0, 16], sizes = [8, 16], strides = [1, 1]} : vector<8x128xf32> to vector<8x16xf32>
    %107 = arith.addf %105, %106 : vector<8x16xf32>
    %108 = arith.mulf %105, %106 : vector<8x16xf32>
    %cst_38 = arith.constant 2.000000e+00 : f32
    %109 = vector.broadcast %cst_38 : f32 to vector<8x16xf32>
    %110 = arith.mulf %109, %108 : vector<8x16xf32>
    %111 = arith.subf %107, %110 : vector<8x16xf32>
    %cst_39 = arith.constant dense<0.000000e+00> : vector<8x128xf32>
    %112 = tpu.matmul %111, %4, %cst_39 {dimension_numbers = #tpu.dot_dimension_numbers<[1], [0], [0], [1], [0, 0, 1, 1], [], []>} : vector<8x16xf32>, vector<16x128xf32>, vector<8x128xf32> -> vector<8x128xf32>
    %113 = vector.broadcast %6 : vector<1x128xf32> to vector<8x128xf32>
    %114 = arith.addf %112, %113 : vector<8x128xf32>
    %115 = arith.addf %99, %114 : vector<8x128xf32>
    %116 = arith.index_cast %c3_i32 : i32 to index
    %c0_40 = arith.constant 0 : index
    %c0_41 = arith.constant 0 : index
    %117 = vector.load %arg8[%116, %c0_40, %c0_41] : memref<8x8x128xf32, #tpu.memory_space<vmem>>, vector<1x8x128xf32>
    %118 = vector.shape_cast %117 : vector<1x8x128xf32> to vector<8x128xf32>
    %119 = vector.shape_cast %115 : vector<8x128xf32> to vector<1x8x128xf32>
    tpu.vector_store %arg8[%116, %c0_40, %c0_41], %119 {strides = array<i32>} : memref<8x8x128xf32, #tpu.memory_space<vmem>>, vector<1x8x128xf32>,
    %c4_i32 = arith.constant 4 : i32
    %120 = arith.index_cast %c4_i32 : i32 to index
    %c0_42 = arith.constant 0 : index
    %c0_43 = arith.constant 0 : index
    %121 = vector.load %arg2[%120, %c0_42, %c0_43] : memref<8x8x128xf32, #tpu.memory_space<vmem>>, vector<1x8x128xf32>
    %122 = vector.shape_cast %121 : vector<1x8x128xf32> to vector<8x128xf32>
    %cst_44 = arith.constant dense<0.000000e+00> : vector<8x128xf32>
    %123 = tpu.matmul %115, %3, %cst_44 {dimension_numbers = #tpu.dot_dimension_numbers<[1], [0], [0], [1], [0, 0, 1, 1], [], []>} : vector<8x128xf32>, vector<128x128xf32>, vector<8x128xf32> -> vector<8x128xf32>
    %124 = arith.addf %122, %123 : vector<8x128xf32>
    %125 = math.tanh %124 : vector<8x128xf32>
    %126 = vector.broadcast %5 : vector<1x128xf32> to vector<8x128xf32>
    %127 = arith.mulf %125, %126 : vector<8x128xf32>
    %128 = arith.negf %127 : vector<8x128xf32>
    %129 = math.exp %128 : vector<8x128xf32>
    %cst_45 = arith.constant 1.000000e+00 : f32
    %130 = vector.broadcast %cst_45 : f32 to vector<8x128xf32>
    %131 = arith.addf %130, %129 : vector<8x128xf32>
    %132 = arith.divf %130, %131 : vector<8x128xf32>
    %133 = vector.extract_strided_slice %132 {offsets = [0, 0], sizes = [8, 16], strides = [1, 1]} : vector<8x128xf32> to vector<8x16xf32>
    %134 = vector.extract_strided_slice %132 {offsets = [0, 16], sizes = [8, 16], strides = [1, 1]} : vector<8x128xf32> to vector<8x16xf32>
    %135 = arith.addf %133, %134 : vector<8x16xf32>
    %136 = arith.mulf %133, %134 : vector<8x16xf32>
    %cst_46 = arith.constant 2.000000e+00 : f32
    %137 = vector.broadcast %cst_46 : f32 to vector<8x16xf32>
    %138 = arith.mulf %137, %136 : vector<8x16xf32>
    %139 = arith.subf %135, %138 : vector<8x16xf32>
    %cst_47 = arith.constant dense<0.000000e+00> : vector<8x128xf32>
    %140 = tpu.matmul %139, %4, %cst_47 {dimension_numbers = #tpu.dot_dimension_numbers<[1], [0], [0], [1], [0, 0, 1, 1], [], []>} : vector<8x16xf32>, vector<16x128xf32>, vector<8x128xf32> -> vector<8x128xf32>
    %141 = vector.broadcast %6 : vector<1x128xf32> to vector<8x128xf32>
    %142 = arith.addf %140, %141 : vector<8x128xf32>
    %143 = arith.addf %127, %142 : vector<8x128xf32>
    %144 = arith.index_cast %c4_i32 : i32 to index
    %c0_48 = arith.constant 0 : index
    %c0_49 = arith.constant 0 : index
    %145 = vector.load %arg8[%144, %c0_48, %c0_49] : memref<8x8x128xf32, #tpu.memory_space<vmem>>, vector<1x8x128xf32>
    %146 = vector.shape_cast %145 : vector<1x8x128xf32> to vector<8x128xf32>
    %147 = vector.shape_cast %143 : vector<8x128xf32> to vector<1x8x128xf32>
    tpu.vector_store %arg8[%144, %c0_48, %c0_49], %147 {strides = array<i32>} : memref<8x8x128xf32, #tpu.memory_space<vmem>>, vector<1x8x128xf32>,
    %c5_i32 = arith.constant 5 : i32
    %148 = arith.index_cast %c5_i32 : i32 to index
    %c0_50 = arith.constant 0 : index
    %c0_51 = arith.constant 0 : index
    %149 = vector.load %arg2[%148, %c0_50, %c0_51] : memref<8x8x128xf32, #tpu.memory_space<vmem>>, vector<1x8x128xf32>
    %150 = vector.shape_cast %149 : vector<1x8x128xf32> to vector<8x128xf32>
    %cst_52 = arith.constant dense<0.000000e+00> : vector<8x128xf32>
    %151 = tpu.matmul %143, %3, %cst_52 {dimension_numbers = #tpu.dot_dimension_numbers<[1], [0], [0], [1], [0, 0, 1, 1], [], []>} : vector<8x128xf32>, vector<128x128xf32>, vector<8x128xf32> -> vector<8x128xf32>
    %152 = arith.addf %150, %151 : vector<8x128xf32>
    %153 = math.tanh %152 : vector<8x128xf32>
    %154 = vector.broadcast %5 : vector<1x128xf32> to vector<8x128xf32>
    %155 = arith.mulf %153, %154 : vector<8x128xf32>
    %156 = arith.negf %155 : vector<8x128xf32>
    %157 = math.exp %156 : vector<8x128xf32>
    %cst_53 = arith.constant 1.000000e+00 : f32
    %158 = vector.broadcast %cst_53 : f32 to vector<8x128xf32>
    %159 = arith.addf %158, %157 : vector<8x128xf32>
    %160 = arith.divf %158, %159 : vector<8x128xf32>
    %161 = vector.extract_strided_slice %160 {offsets = [0, 0], sizes = [8, 16], strides = [1, 1]} : vector<8x128xf32> to vector<8x16xf32>
    %162 = vector.extract_strided_slice %160 {offsets = [0, 16], sizes = [8, 16], strides = [1, 1]} : vector<8x128xf32> to vector<8x16xf32>
    %163 = arith.addf %161, %162 : vector<8x16xf32>
    %164 = arith.mulf %161, %162 : vector<8x16xf32>
    %cst_54 = arith.constant 2.000000e+00 : f32
    %165 = vector.broadcast %cst_54 : f32 to vector<8x16xf32>
    %166 = arith.mulf %165, %164 : vector<8x16xf32>
    %167 = arith.subf %163, %166 : vector<8x16xf32>
    %cst_55 = arith.constant dense<0.000000e+00> : vector<8x128xf32>
    %168 = tpu.matmul %167, %4, %cst_55 {dimension_numbers = #tpu.dot_dimension_numbers<[1], [0], [0], [1], [0, 0, 1, 1], [], []>} : vector<8x16xf32>, vector<16x128xf32>, vector<8x128xf32> -> vector<8x128xf32>
    %169 = vector.broadcast %6 : vector<1x128xf32> to vector<8x128xf32>
    %170 = arith.addf %168, %169 : vector<8x128xf32>
    %171 = arith.addf %155, %170 : vector<8x128xf32>
    %172 = arith.index_cast %c5_i32 : i32 to index
    %c0_56 = arith.constant 0 : index
    %c0_57 = arith.constant 0 : index
    %173 = vector.load %arg8[%172, %c0_56, %c0_57] : memref<8x8x128xf32, #tpu.memory_space<vmem>>, vector<1x8x128xf32>
    %174 = vector.shape_cast %173 : vector<1x8x128xf32> to vector<8x128xf32>
    %175 = vector.shape_cast %171 : vector<8x128xf32> to vector<1x8x128xf32>
    tpu.vector_store %arg8[%172, %c0_56, %c0_57], %175 {strides = array<i32>} : memref<8x8x128xf32, #tpu.memory_space<vmem>>, vector<1x8x128xf32>,
    %c6_i32 = arith.constant 6 : i32
    %176 = arith.index_cast %c6_i32 : i32 to index
    %c0_58 = arith.constant 0 : index
    %c0_59 = arith.constant 0 : index
    %177 = vector.load %arg2[%176, %c0_58, %c0_59] : memref<8x8x128xf32, #tpu.memory_space<vmem>>, vector<1x8x128xf32>
    %178 = vector.shape_cast %177 : vector<1x8x128xf32> to vector<8x128xf32>
    %cst_60 = arith.constant dense<0.000000e+00> : vector<8x128xf32>
    %179 = tpu.matmul %171, %3, %cst_60 {dimension_numbers = #tpu.dot_dimension_numbers<[1], [0], [0], [1], [0, 0, 1, 1], [], []>} : vector<8x128xf32>, vector<128x128xf32>, vector<8x128xf32> -> vector<8x128xf32>
    %180 = arith.addf %178, %179 : vector<8x128xf32>
    %181 = math.tanh %180 : vector<8x128xf32>
    %182 = vector.broadcast %5 : vector<1x128xf32> to vector<8x128xf32>
    %183 = arith.mulf %181, %182 : vector<8x128xf32>
    %184 = arith.negf %183 : vector<8x128xf32>
    %185 = math.exp %184 : vector<8x128xf32>
    %cst_61 = arith.constant 1.000000e+00 : f32
    %186 = vector.broadcast %cst_61 : f32 to vector<8x128xf32>
    %187 = arith.addf %186, %185 : vector<8x128xf32>
    %188 = arith.divf %186, %187 : vector<8x128xf32>
    %189 = vector.extract_strided_slice %188 {offsets = [0, 0], sizes = [8, 16], strides = [1, 1]} : vector<8x128xf32> to vector<8x16xf32>
    %190 = vector.extract_strided_slice %188 {offsets = [0, 16], sizes = [8, 16], strides = [1, 1]} : vector<8x128xf32> to vector<8x16xf32>
    %191 = arith.addf %189, %190 : vector<8x16xf32>
    %192 = arith.mulf %189, %190 : vector<8x16xf32>
    %cst_62 = arith.constant 2.000000e+00 : f32
    %193 = vector.broadcast %cst_62 : f32 to vector<8x16xf32>
    %194 = arith.mulf %193, %192 : vector<8x16xf32>
    %195 = arith.subf %191, %194 : vector<8x16xf32>
    %cst_63 = arith.constant dense<0.000000e+00> : vector<8x128xf32>
    %196 = tpu.matmul %195, %4, %cst_63 {dimension_numbers = #tpu.dot_dimension_numbers<[1], [0], [0], [1], [0, 0, 1, 1], [], []>} : vector<8x16xf32>, vector<16x128xf32>, vector<8x128xf32> -> vector<8x128xf32>
    %197 = vector.broadcast %6 : vector<1x128xf32> to vector<8x128xf32>
    %198 = arith.addf %196, %197 : vector<8x128xf32>
    %199 = arith.addf %183, %198 : vector<8x128xf32>
    %200 = arith.index_cast %c6_i32 : i32 to index
    %c0_64 = arith.constant 0 : index
    %c0_65 = arith.constant 0 : index
    %201 = vector.load %arg8[%200, %c0_64, %c0_65] : memref<8x8x128xf32, #tpu.memory_space<vmem>>, vector<1x8x128xf32>
    %202 = vector.shape_cast %201 : vector<1x8x128xf32> to vector<8x128xf32>
    %203 = vector.shape_cast %199 : vector<8x128xf32> to vector<1x8x128xf32>
    tpu.vector_store %arg8[%200, %c0_64, %c0_65], %203 {strides = array<i32>} : memref<8x8x128xf32, #tpu.memory_space<vmem>>, vector<1x8x128xf32>,
    %c7_i32 = arith.constant 7 : i32
    %204 = arith.index_cast %c7_i32 : i32 to index
    %c0_66 = arith.constant 0 : index
    %c0_67 = arith.constant 0 : index
    %205 = vector.load %arg2[%204, %c0_66, %c0_67] : memref<8x8x128xf32, #tpu.memory_space<vmem>>, vector<1x8x128xf32>
    %206 = vector.shape_cast %205 : vector<1x8x128xf32> to vector<8x128xf32>
    %cst_68 = arith.constant dense<0.000000e+00> : vector<8x128xf32>
    %207 = tpu.matmul %199, %3, %cst_68 {dimension_numbers = #tpu.dot_dimension_numbers<[1], [0], [0], [1], [0, 0, 1, 1], [], []>} : vector<8x128xf32>, vector<128x128xf32>, vector<8x128xf32> -> vector<8x128xf32>
    %208 = arith.addf %206, %207 : vector<8x128xf32>
    %209 = math.tanh %208 : vector<8x128xf32>
    %210 = vector.broadcast %5 : vector<1x128xf32> to vector<8x128xf32>
    %211 = arith.mulf %209, %210 : vector<8x128xf32>
    %212 = arith.negf %211 : vector<8x128xf32>
    %213 = math.exp %212 : vector<8x128xf32>
    %cst_69 = arith.constant 1.000000e+00 : f32
    %214 = vector.broadcast %cst_69 : f32 to vector<8x128xf32>
    %215 = arith.addf %214, %213 : vector<8x128xf32>
    %216 = arith.divf %214, %215 : vector<8x128xf32>
    %217 = vector.extract_strided_slice %216 {offsets = [0, 0], sizes = [8, 16], strides = [1, 1]} : vector<8x128xf32> to vector<8x16xf32>
    %218 = vector.extract_strided_slice %216 {offsets = [0, 16], sizes = [8, 16], strides = [1, 1]} : vector<8x128xf32> to vector<8x16xf32>
    %219 = arith.addf %217, %218 : vector<8x16xf32>
    %220 = arith.mulf %217, %218 : vector<8x16xf32>
    %cst_70 = arith.constant 2.000000e+00 : f32
    %221 = vector.broadcast %cst_70 : f32 to vector<8x16xf32>
    %222 = arith.mulf %221, %220 : vector<8x16xf32>
    %223 = arith.subf %219, %222 : vector<8x16xf32>
    %cst_71 = arith.constant dense<0.000000e+00> : vector<8x128xf32>
    %224 = tpu.matmul %223, %4, %cst_71 {dimension_numbers = #tpu.dot_dimension_numbers<[1], [0], [0], [1], [0, 0, 1, 1], [], []>} : vector<8x16xf32>, vector<16x128xf32>, vector<8x128xf32> -> vector<8x128xf32>
    %225 = vector.broadcast %6 : vector<1x128xf32> to vector<8x128xf32>
    %226 = arith.addf %224, %225 : vector<8x128xf32>
    %227 = arith.addf %211, %226 : vector<8x128xf32>
    %228 = arith.index_cast %c7_i32 : i32 to index
    %c0_72 = arith.constant 0 : index
    %c0_73 = arith.constant 0 : index
    %229 = vector.load %arg8[%228, %c0_72, %c0_73] : memref<8x8x128xf32, #tpu.memory_space<vmem>>, vector<1x8x128xf32>
    %230 = vector.shape_cast %229 : vector<1x8x128xf32> to vector<8x128xf32>
    %231 = vector.shape_cast %227 : vector<8x128xf32> to vector<1x8x128xf32>
    tpu.vector_store %arg8[%228, %c0_72, %c0_73], %231 {strides = array<i32>} : memref<8x8x128xf32, #tpu.memory_space<vmem>>, vector<1x8x128xf32>,
    %c8_i32 = arith.constant 8 : i32
    %c0_74 = arith.constant 0 : index
    %c0_75 = arith.constant 0 : index
    %232 = vector.load %arg9[%c0_74, %c0_75] : memref<8x128xf32, #tpu.memory_space<vmem>>, vector<8x128xf32>
    tpu.vector_store %arg9[%c0_74, %c0_75], %227 {strides = array<i32>} : memref<8x128xf32, #tpu.memory_space<vmem>>, vector<8x128xf32>,
    return
  }
  func.func @transform_0(%arg0: i32, %arg1: i32) -> (i32, i32, i32) {
    %c0_i32 = arith.constant 0 : i32
    %c0_i32_0 = arith.constant 0 : i32
    return %arg1, %arg0, %c0_i32 : i32, i32, i32
  }
  func.func @transform_1(%arg0: i32, %arg1: i32) -> (i32, i32) {
    %c0_i32 = arith.constant 0 : i32
    %c0_i32_0 = arith.constant 0 : i32
    return %arg0, %c0_i32 : i32, i32
  }
  func.func @transform_2(%arg0: i32, %arg1: i32) -> (i32, i32) {
    %c0_i32 = arith.constant 0 : i32
    %c0_i32_0 = arith.constant 0 : i32
    %c0_i32_1 = arith.constant 0 : i32
    return %c0_i32, %c0_i32_0 : i32, i32
  }
  func.func @transform_3(%arg0: i32, %arg1: i32) -> (i32, i32) {
    %c0_i32 = arith.constant 0 : i32
    %c0_i32_0 = arith.constant 0 : i32
    %c0_i32_1 = arith.constant 0 : i32
    return %c0_i32, %c0_i32_0 : i32, i32
  }
  func.func @transform_4(%arg0: i32, %arg1: i32) -> (i32, i32) {
    %c0_i32 = arith.constant 0 : i32
    %c0_i32_0 = arith.constant 0 : i32
    %c0_i32_1 = arith.constant 0 : i32
    return %c0_i32, %c0_i32_0 : i32, i32
  }
  func.func @transform_5(%arg0: i32, %arg1: i32) -> (i32, i32) {
    %c0_i32 = arith.constant 0 : i32
    %c0_i32_0 = arith.constant 0 : i32
    %c0_i32_1 = arith.constant 0 : i32
    return %c0_i32, %c0_i32_0 : i32, i32
  }
  func.func @transform_6(%arg0: i32, %arg1: i32) -> (i32, i32, i32) {
    %c0_i32 = arith.constant 0 : i32
    %c0_i32_0 = arith.constant 0 : i32
    return %arg1, %arg0, %c0_i32 : i32, i32, i32
  }
}

</mosaic_0001>

<llo_original>
// kernel: tpu_custom_call.1
$region0: #{tpu_custom_call.1}
  #allocation0 [shape = 'u32[]', space=smem, size = 0x4, offset = 0x4, fixed_abs, tag = 'smem constant byte address 0x4 - core index']
  #allocation1 [shape = 'u32[144,128]{1,0:T(1,128)}', space=vmem, size = 0x12000, scoped, tag = 'internal scratch']
  #allocation2 [shape = 'f32[8,128]{1,0:T(8,128)}', space=vmem, size = 0x1000, scoped, tag = 'scratch operand']
  %s0 = inlined_call_operand.hbm [shape: f32[16,8,128], index: 0, kind: input, shape index: {}]
  %s1 = inlined_call_operand.hbm [shape: f32[8,128], index: 1, kind: input, shape index: {}]
  %s2 = inlined_call_operand.hbm [shape: f32[128,128], index: 2, kind: input, shape index: {}]
  %s3 = inlined_call_operand.vmem [shape: f32[1,128], index: 3, kind: input, shape index: {}]
  %s4 = inlined_call_operand.hbm [shape: f32[16,128], index: 4, kind: input, shape index: {}]
  %s5 = inlined_call_operand.vmem [shape: f32[1,128], index: 5, kind: input, shape index: {}]
  %s6 = inlined_call_operand.hbm [shape: f32[16,8,128], index: 6, kind: output, shape index: {}]
  %s7 = sld [smem:[#allocation0]]
  $region77: #{tpu_custom_call.1} parent=0
    _
  %s9 = ssub.s32 1, %s7
  %s10 = scalar_select 0, %s9, %s7
  $region1: #{tpu_custom_call.1} parent=0
    #allocation3 [shape = 'u8[65536]{0}', space=vmem, size = 0x10000, scoped, tag = 'input window, operand 0']
    #allocation4 [shape = 's32[2]{0}', space=sflag, size = 0x8, scoped, tag = 'scoped memory for tpu_custom_call.1']
    #allocation5 [shape = 's32[2]{0}', space=sflag, size = 0x8, scoped, tag = 'scoped memory for tpu_custom_call.1']
    #allocation6 [shape = 'u8[4096]{0}', space=vmem, size = 0x1000, scoped, tag = 'input window, operand 1, single buffered']
    #allocation7 [shape = 's32[1]{0}', space=sflag, size = 0x4, scoped, tag = 'scoped memory for tpu_custom_call.1']
    #allocation8 [shape = 'u8[65536]{0}', space=vmem, size = 0x10000, scoped, tag = 'input window, operand 2, single buffered']
    #allocation9 [shape = 'u8[8192]{0}', space=vmem, size = 0x2000, scoped, tag = 'input window, operand 4, single buffered']
    #allocation10 [shape = 's32[1]{0}', space=sflag, size = 0x4, scoped, tag = 'scoped memory for tpu_custom_call.1']
    #allocation11 [shape = 'u8[65536]{0}', space=vmem, size = 0x10000, scoped, tag = 'output window, operand 0']
    %11 = vsyncpa [#allocation4], 0
    %s12 = scalar_lea.sflag [#allocation4], 1
    %13 = vsyncpa %s12, 0
    %14 = vsyncpa [#allocation7], 0
    %15 = vsyncpa [#allocation10], 0
    %16 = vsyncpa [#allocation5], 0
    %s17 = scalar_lea.sflag [#allocation5], 1
    %18 = vsyncpa %s17, 0
    loop: start=0, step=1, limit=4
    $region2: #{tpu_custom_call.1} parent=1 // loop_pre_header
      _
    $region3: #{tpu_custom_call.1} parent=1 // loop_header
      %s20 = sphi 0, %s24
      %p21 = scmp.ge.s32.totalorder %s20, 4
      %s27 = sphi 0, %s39
      %s28 = sphi 0, %s35
      %s29 = sphi 0, %s27
      %s30 = sphi 0, %s28
      %s31 = sphi 0, %s29
      %s32 = sphi 0, %s30
      %s44 = sphi 0, %s46
      %s47 = sphi 0, %s44
      %s48 = sphi 0, %s47
      %s64 = sphi 0, %s48
      %s70 = sphi 0, %s72
      %s73 = sphi 0, %s70
      %s74 = sphi 0, %s73
      %s90 = sphi 0, %s74
      %s94 = sphi 0, %s94
      %s96 = sphi 0, %s94
      %s97 = sphi 0, %s96
      %s111 = sphi 0, %s97
      %s115 = sphi 0, %s115
      %s117 = sphi 0, %s115
      %s118 = sphi 0, %s117
      %s132 = sphi 0, %s118
      %s136 = sphi 0, %s136
      %s138 = sphi 0, %s136
      %s139 = sphi 0, %s138
      %s153 = sphi 0, %s139
      %s157 = sphi 0, %s157
      %s159 = sphi 0, %s157
      %s160 = sphi 0, %s159
      %s174 = sphi 0, %s160
      %s182 = sphi 0, %s184
      %s185 = sphi 0, %s182
      %s186 = sphi 0, %s185
      %s202 = sphi 0, %s186
    $region4: #{tpu_custom_call.1} parent=1 // loop_header_branch
      %23 = sbr.rel (%p21) target = $region8
    $region5: #{tpu_custom_call.1} parent=1 // loop_body
      %s25 = ssub.s32 %s20, 1
      %s26 = ssub.s32 %s20, 2
      %s33 = sadd.s32 1, %s28
      %p34 = scmp.ge.s32.totalorder %s33, 2
      %s35 = scalar_select %p34, 0, %s33
      %s36 = sadd.s32 1, %s27
      %s37 = scalar_select %p34, %s36, %s27
      %p38 = scmp.ge.s32.totalorder %s37, 1
      %s39 = scalar_select %p38, 0, %s37
      %s40 = ssub.s32 %s28, %s35
      %s41 = ssub.s32 %s27, %s39
      %s42 = sor.u32 %s40, %s41
      %p43 = scmp.eq.s32.totalorder %s42, 0
      %s45 = sadd.s32 %s44, 1
      %s46 = scalar_select %p43, %s44, %s45
      %p49 = pneg %p43
      %p50 = scmp.eq.s32.totalorder %s20, 1
      %p51 = por %p49, %p50
      %p52 = scmp.ne.s32.totalorder %s44, %s47
      %p53 = scmp.eq.s32.totalorder %s20, 0
      %p54 = por %p52, %p53
      %p55 = scmp.ne.s32.totalorder %s44, %s47
      %p56 = scmp.eq.s32.totalorder %s25, 1
      %p57 = por %p55, %p56
      %p58 = scmp.ne.s32.totalorder %s47, %s48
      %p59 = scmp.eq.s32.totalorder %s25, 0
      %p60 = por %p58, %p59
      %p61 = scmp.ne.s32.totalorder %s47, %s48
      %p62 = scmp.eq.s32.totalorder %s26, 1
      %p63 = por %p61, %p62
      %p65 = scmp.ne.s32.totalorder %s48, %s64
      %p66 = scmp.eq.s32.totalorder %s26, 0
      %p67 = por %p65, %p66
      %s68 = ssub.s32 %s27, %s39
      %p69 = scmp.eq.s32.totalorder %s68, 0
      %s71 = sadd.s32 %s70, 1
      %s72 = scalar_select %p69, %s70, %s71
      %p75 = pneg %p69
      %p76 = scmp.eq.s32.totalorder %s20, 1
      %p77 = por %p75, %p76
      %p78 = scmp.ne.s32.totalorder %s70, %s73
      %p79 = scmp.eq.s32.totalorder %s20, 0
      %p80 = por %p78, %p79
      %p81 = scmp.ne.s32.totalorder %s70, %s73
      %p82 = scmp.eq.s32.totalorder %s25, 1
      %p83 = por %p81, %p82
      %p84 = scmp.ne.s32.totalorder %s73, %s74
      %p85 = scmp.eq.s32.totalorder %s25, 0
      %p86 = por %p84, %p85
      %p87 = scmp.ne.s32.totalorder %s73, %s74
      %p88 = scmp.eq.s32.totalorder %s26, 1
      %p89 = por %p87, %p88
      %p91 = scmp.ne.s32.totalorder %s74, %s90
      %p92 = scmp.eq.s32.totalorder %s26, 0
      %p93 = por %p91, %p92
      %s95 = sadd.s32 %s94, 1
      %p98 = scmp.eq.s32.totalorder %s20, 1
      %p99 = scmp.ne.s32.totalorder %s94, %s96
      %p100 = scmp.eq.s32.totalorder %s20, 0
      %p101 = por %p99, %p100
      %p102 = scmp.ne.s32.totalorder %s94, %s96
      %p103 = scmp.eq.s32.totalorder %s25, 1
      %p104 = por %p102, %p103
      %p105 = scmp.ne.s32.totalorder %s96, %s97
      %p106 = scmp.eq.s32.totalorder %s25, 0
      %p107 = por %p105, %p106
      %p108 = scmp.ne.s32.totalorder %s96, %s97
      %p109 = scmp.eq.s32.totalorder %s26, 1
      %p110 = por %p108, %p109
      %p112 = scmp.ne.s32.totalorder %s97, %s111
      %p113 = scmp.eq.s32.totalorder %s26, 0
      %p114 = por %p112, %p113
      %s116 = sadd.s32 %s115, 1
      %p119 = scmp.eq.s32.totalorder %s20, 1
      %p120 = scmp.ne.s32.totalorder %s115, %s117
      %p121 = scmp.eq.s32.totalorder %s20, 0
      %p122 = por %p120, %p121
      %p123 = scmp.ne.s32.totalorder %s115, %s117
      %p124 = scmp.eq.s32.totalorder %s25, 1
      %p125 = por %p123, %p124
      %p126 = scmp.ne.s32.totalorder %s117, %s118
      %p127 = scmp.eq.s32.totalorder %s25, 0
      %p128 = por %p126, %p127
      %p129 = scmp.ne.s32.totalorder %s117, %s118
      %p130 = scmp.eq.s32.totalorder %s26, 1
      %p131 = por %p129, %p130
      %p133 = scmp.ne.s32.totalorder %s118, %s132
      %p134 = scmp.eq.s32.totalorder %s26, 0
      %p135 = por %p133, %p134
      %s137 = sadd.s32 %s136, 1
      %p140 = scmp.eq.s32.totalorder %s20, 1
      %p141 = scmp.ne.s32.totalorder %s136, %s138
      %p142 = scmp.eq.s32.totalorder %s20, 0
      %p143 = por %p141, %p142
      %p144 = scmp.ne.s32.totalorder %s136, %s138
      %p145 = scmp.eq.s32.totalorder %s25, 1
      %p146 = por %p144, %p145
      %p147 = scmp.ne.s32.totalorder %s138, %s139
      %p148 = scmp.eq.s32.totalorder %s25, 0
      %p149 = por %p147, %p148
      %p150 = scmp.ne.s32.totalorder %s138, %s139
      %p151 = scmp.eq.s32.totalorder %s26, 1
      %p152 = por %p150, %p151
      %p154 = scmp.ne.s32.totalorder %s139, %s153
      %p155 = scmp.eq.s32.totalorder %s26, 0
      %p156 = por %p154, %p155
      %s158 = sadd.s32 %s157, 1
      %p161 = scmp.eq.s32.totalorder %s20, 1
      %p162 = scmp.ne.s32.totalorder %s157, %s159
      %p163 = scmp.eq.s32.totalorder %s20, 0
      %p164 = por %p162, %p163
      %p165 = scmp.ne.s32.totalorder %s157, %s159
      %p166 = scmp.eq.s32.totalorder %s25, 1
      %p167 = por %p165, %p166
      %p168 = scmp.ne.s32.totalorder %s159, %s160
      %p169 = scmp.eq.s32.totalorder %s25, 0
      %p170 = por %p168, %p169
      %p171 = scmp.ne.s32.totalorder %s159, %s160
      %p172 = scmp.eq.s32.totalorder %s26, 1
      %p173 = por %p171, %p172
      %p175 = scmp.ne.s32.totalorder %s160, %s174
      %p176 = scmp.eq.s32.totalorder %s26, 0
      %p177 = por %p175, %p176
      %s178 = ssub.s32 %s28, %s35
      %s179 = ssub.s32 %s27, %s39
      %s180 = sor.u32 %s178, %s179
      %p181 = scmp.eq.s32.totalorder %s180, 0
      %s183 = sadd.s32 %s182, 1
      %s184 = scalar_select %p181, %s182, %s183
      %p187 = pneg %p181
      %p188 = scmp.eq.s32.totalorder %s20, 1
      %p189 = por %p187, %p188
      %p190 = scmp.ne.s32.totalorder %s182, %s185
      %p191 = scmp.eq.s32.totalorder %s20, 0
      %p192 = por %p190, %p191
      %p193 = scmp.ne.s32.totalorder %s182, %s185
      %p194 = scmp.eq.s32.totalorder %s25, 1
      %p195 = por %p193, %p194
      %p196 = scmp.ne.s32.totalorder %s185, %s186
      %p197 = scmp.eq.s32.totalorder %s25, 0
      %p198 = por %p196, %p197
      %p199 = scmp.ne.s32.totalorder %s185, %s186
      %p200 = scmp.eq.s32.totalorder %s26, 1
      %p201 = por %p199, %p200
      %p203 = scmp.ne.s32.totalorder %s186, %s202
      %p204 = scmp.eq.s32.totalorder %s26, 0
      %p205 = por %p203, %p204
      %p206 = scmp.le.s32.totalorder 1, %s20
      %p207 = scmp.lt.s32.totalorder %s20, 3
      %p208 = pnand %p206, %p207
      %p209 = pneg %p208
      // Predicated region
      $region9: #{tpu_custom_call.1} parent=5 // pred_check
        _
      $region10: #{tpu_custom_call.1} parent=5 // pred_check_branch
        %211 = sbr.rel (%p208) target = $region12
      $region11: #{tpu_custom_call.1} parent=5 // pred_region
        %s212 = ssub.s32 %s20, 1
        // Predicated region
        $region13: #{tpu_custom_call.1} parent=11 // pred_check
          %p213 = pneg %p86
        $region14: #{tpu_custom_call.1} parent=11 // pred_check_branch
          %215 = sbr.rel (%p213) target = $region16
        $region15: #{tpu_custom_call.1} parent=11 // pred_region
          %s217 = ssub.s32 128, 128
          %218 = vsyncadd [#allocation7], %s217
          %s219 = smul.addr %s29, 128
          %s220 = scalar_lea.hbm %s1, %s219
          %s222 = sshll.u32 [#allocation6], 4
          %s223 = int_to_ptr.vmem [resolvable:$true] %s222
          %225 = dma.hbm_to_vmem [thread:$0]  %s220, 128, %s223, [#allocation7]
        $region16: #{tpu_custom_call.1} parent=11 // pred_fallthru
          _
        // Predicated region
        $region17: #{tpu_custom_call.1} parent=11 // pred_check
          %p226 = pneg %p107
        $region18: #{tpu_custom_call.1} parent=11 // pred_check_branch
          %228 = sbr.rel (%p226) target = $region20
        $region19: #{tpu_custom_call.1} parent=11 // pred_region
          %s230 = ssub.s32 2048, 2048
          %231 = vsyncadd [#allocation7], %s230
          %s232 = sshll.u32 [#allocation8], 4
          %s233 = int_to_ptr.vmem [resolvable:$true] %s232
          %238 = dma.hbm_to_vmem [thread:$0]  %s2, 2048, %s233, [#allocation7], 128, 128, 8
        $region20: #{tpu_custom_call.1} parent=11 // pred_fallthru
          _
        // Predicated region
        $region21: #{tpu_custom_call.1} parent=11 // pred_check
          %p239 = pneg %p128
        $region22: #{tpu_custom_call.1} parent=11 // pred_check_branch
          %241 = sbr.rel (%p239) target = $region24
        $region23: #{tpu_custom_call.1} parent=11 // pred_region
          _
        $region24: #{tpu_custom_call.1} parent=11 // pred_fallthru
          _
        // Predicated region
        $region25: #{tpu_custom_call.1} parent=11 // pred_check
          %p242 = pneg %p149
        $region26: #{tpu_custom_call.1} parent=11 // pred_check_branch
          %244 = sbr.rel (%p242) target = $region28
        $region27: #{tpu_custom_call.1} parent=11 // pred_region
          %s246 = ssub.s32 256, 256
          %247 = vsyncadd [#allocation10], %s246
          %s248 = sshll.u32 [#allocation9], 4
          %s249 = int_to_ptr.vmem [resolvable:$true] %s248
          %254 = dma.hbm_to_vmem [thread:$0]  %s4, 256, %s249, [#allocation10], 128, 128, 8
        $region28: #{tpu_custom_call.1} parent=11 // pred_fallthru
          _
        // Predicated region
        $region29: #{tpu_custom_call.1} parent=11 // pred_check
          %p255 = pneg %p170
        $region30: #{tpu_custom_call.1} parent=11 // pred_check_branch
          %257 = sbr.rel (%p255) target = $region32
        $region31: #{tpu_custom_call.1} parent=11 // pred_region
          _
        $region32: #{tpu_custom_call.1} parent=11 // pred_fallthru
          _
      $region12: #{tpu_custom_call.1} parent=5 // pred_fallthru
        _
      %p258 = scmp.lt.s32.totalorder %s20, 2
      // Predicated region
      $region33: #{tpu_custom_call.1} parent=5 // pred_check
        %p259 = pneg %p258
      $region34: #{tpu_custom_call.1} parent=5 // pred_check_branch
        %261 = sbr.rel (%p259) target = $region36
      $region35: #{tpu_custom_call.1} parent=5 // pred_region
        // Predicated region
        $region37: #{tpu_custom_call.1} parent=35 // pred_check
          %p262 = pneg %p54
        $region38: #{tpu_custom_call.1} parent=35 // pred_check_branch
          %264 = sbr.rel (%p262) target = $region40
        $region39: #{tpu_custom_call.1} parent=35 // pred_region
          %s265 = sand.u32 %s44, 1
          %s266 = scalar_lea.sflag [#allocation4], %s265
          %s267 = sand.u32 %s44, 1
          %s268 = smul.addr %s267, 64
          %s269 = scalar_lea.vmem [#allocation3], %s268
          %s270 = smul.u32 8, %s28
          %s272 = ssub.s32 1024, 1024
          %273 = vsyncadd %s266, %s272
          %s274 = sadd.s32 %s27, %s270
          %s275 = smul.addr %s274, 128
          %s276 = scalar_lea.hbm %s0, %s275
          %s277 = sshll.u32 %s269, 4
          %s278 = int_to_ptr.vmem [resolvable:$true] %s277
          %283 = dma.hbm_to_vmem [thread:$0]  %s276, 1024, %s278, %s266, 128, 128, 8
        $region40: #{tpu_custom_call.1} parent=35 // pred_fallthru
          _
      $region36: #{tpu_custom_call.1} parent=5 // pred_fallthru
        _
      %p284 = scmp.le.s32.totalorder 1, %s20
      %p285 = scmp.lt.s32.totalorder %s20, 3
      %p286 = pnand %p284, %p285
      %p287 = pneg %p286
      // Predicated region
      $region41: #{tpu_custom_call.1} parent=5 // pred_check
        _
      $region42: #{tpu_custom_call.1} parent=5 // pred_check_branch
        %289 = sbr.rel (%p286) target = $region44
      $region43: #{tpu_custom_call.1} parent=5 // pred_region
        %s290 = ssub.s32 %s20, 1
        %s291 = sand.u32 %s47, 1
        %s292 = scalar_lea.sflag [#allocation4], %s291
        %s293 = sand.u32 %s47, 1
        %s294 = smul.addr %s293, 64
        %s295 = scalar_lea.vmem [#allocation3], %s294
        // Predicated region
        $region45: #{tpu_custom_call.1} parent=43 // pred_check
          %p296 = pneg %p60
        $region46: #{tpu_custom_call.1} parent=43 // pred_check_branch
          %298 = sbr.rel (%p296) target = $region48
        $region47: #{tpu_custom_call.1} parent=43 // pred_region
          %299 = dma.done %s292, 1024
        $region48: #{tpu_custom_call.1} parent=43 // pred_fallthru
          _
        // Predicated region
        $region49: #{tpu_custom_call.1} parent=43 // pred_check
          %p300 = pneg %p86
        $region50: #{tpu_custom_call.1} parent=43 // pred_check_branch
          %302 = sbr.rel (%p300) target = $region52
        $region51: #{tpu_custom_call.1} parent=43 // pred_region
          %303 = dma.done [#allocation7], 128
        $region52: #{tpu_custom_call.1} parent=43 // pred_fallthru
          _
        // Predicated region
        $region53: #{tpu_custom_call.1} parent=43 // pred_check
          %p304 = pneg %p107
        $region54: #{tpu_custom_call.1} parent=43 // pred_check_branch
          %306 = sbr.rel (%p304) target = $region56
        $region55: #{tpu_custom_call.1} parent=43 // pred_region
          %307 = dma.done [#allocation7], 2048
        $region56: #{tpu_custom_call.1} parent=43 // pred_fallthru
          _
        // Predicated region
        $region57: #{tpu_custom_call.1} parent=43 // pred_check
          %p308 = pneg %p149
        $region58: #{tpu_custom_call.1} parent=43 // pred_check_branch
          %310 = sbr.rel (%p308) target = $region60
        $region59: #{tpu_custom_call.1} parent=43 // pred_region
          %311 = dma.done [#allocation10], 256
        $region60: #{tpu_custom_call.1} parent=43 // pred_fallthru
          _
        %s312 = sand.u32 %s47, 1
        %s313 = scalar_lea.sflag [#allocation4], %s312
        %s314 = sand.u32 %s47, 1
        %s315 = smul.addr %s314, 64
        %s316 = scalar_lea.vmem [#allocation3], %s315
        %p317 = pneg %p60
        %p318 = pneg %p57
        %p319 = pneg %p86
        %p320 = pneg %p83
        %p321 = pneg %p107
        %p322 = pneg %p104
        %p323 = pneg %p128
        %p324 = pneg %p125
        %p325 = pneg %p149
        %p326 = pneg %p146
        %p327 = pneg %p170
        %p328 = pneg %p167
        %p329 = pneg %p198
        %p330 = pneg %p195
        %s331 = sand.u32 %s185, 1
        %s332 = scalar_lea.sflag [#allocation5], %s331
        %s333 = sand.u32 %s185, 1
        %s334 = smul.addr %s333, 64
        %s335 = scalar_lea.vmem [#allocation11], %s334
        %s336 = smul.u32 8, %s30
        %s337 = smul.u32 8, %s30
        %p338 = scmp.eq.s32.totalorder %s30, 0
        // Predicated region
        $region61: #{tpu_custom_call.1} parent=43 // pred_check
          %p339 = pneg %p338
        $region62: #{tpu_custom_call.1} parent=43 // pred_check_branch
          %341 = sbr.rel (%p339) target = $region64
        $region63: #{tpu_custom_call.1} parent=43 // pred_region
          %v342 = vld [vmem:[#allocation6] sm:$0xff]
          %343 = vst [vmem:[#allocation2] sm:$0xff] %v342
        $region64: #{tpu_custom_call.1} parent=43 // pred_fallthru
          _
        %v344 = vld [vmem:[#allocation8] sm:$0xff]
        %v345 = vld [vmem:[#allocation8 + $0x8] sm:$0xff]
        %v346 = vld [vmem:[#allocation8 + $0x10] sm:$0xff]
        %v347 = vld [vmem:[#allocation8 + $0x18] sm:$0xff]
        %v348 = vld [vmem:[#allocation8 + $0x20] sm:$0xff]
        %v349 = vld [vmem:[#allocation8 + $0x28] sm:$0xff]
        %v350 = vld [vmem:[#allocation8 + $0x30] sm:$0xff]
        %v351 = vld [vmem:[#allocation8 + $0x38] sm:$0xff]
        %v352 = vld [vmem:[#allocation8 + $0x40] sm:$0xff]
        %v353 = vld [vmem:[#allocation8 + $0x48] sm:$0xff]
        %v354 = vld [vmem:[#allocation8 + $0x50] sm:$0xff]
        %v355 = vld [vmem:[#allocation8 + $0x58] sm:$0xff]
        %v356 = vld [vmem:[#allocation8 + $0x60] sm:$0xff]
        %v357 = vld [vmem:[#allocation8 + $0x68] sm:$0xff]
        %v358 = vld [vmem:[#allocation8 + $0x70] sm:$0xff]
        %v359 = vld [vmem:[#allocation8 + $0x78] sm:$0xff]
        %v360 = vld [vmem:[#allocation9] sm:$0xff]
        %v361 = vld [vmem:[#allocation9 + $0x8] sm:$0xff]
        %v362 = vld [vmem:[%s3] sm:$0x1]
        %v363 = vld [vmem:[%s5] sm:$0x1]
        %v364 = vld [vmem:[#allocation2] sm:$0xff]
        %v365 = vld [vmem:[%s295] sm:$0xff]
        %366 = vmatprep.subr.mxu0 0.0
        %367 = vmatpush1.msra.mxu0 %v344
        %368 = vmatprep.subr.mxu0 0.0
        %369 = vmatpush1.msra.mxu0 %v345
        %370 = vmatprep.subr.mxu0 0.0
        %371 = vmatpush1.msra.mxu0 %v346
        %372 = vmatprep.subr.mxu0 0.0
        %373 = vmatpush1.msra.mxu0 %v347
        %374 = vmatprep.subr.mxu0 0.0
        %375 = vmatpush1.msra.mxu0 %v348
        %376 = vmatprep.subr.mxu0 0.0
        %377 = vmatpush1.msra.mxu0 %v349
        %378 = vmatprep.subr.mxu0 0.0
        %379 = vmatpush1.msra.mxu0 %v350
        %380 = vmatprep.subr.mxu0 0.0
        %381 = vmatpush1.msra.mxu0 %v351
        %382 = vmatprep.subr.mxu0 0.0
        %383 = vmatpush1.msra.mxu0 %v352
        %384 = vmatprep.subr.mxu0 0.0
        %385 = vmatpush1.msra.mxu0 %v353
        %386 = vmatprep.subr.mxu0 0.0
        %387 = vmatpush1.msra.mxu0 %v354
        %388 = vmatprep.subr.mxu0 0.0
        %389 = vmatpush1.msra.mxu0 %v355
        %390 = vmatprep.subr.mxu0 0.0
        %391 = vmatpush1.msra.mxu0 %v356
        %392 = vmatprep.subr.mxu0 0.0
        %393 = vmatpush1.msra.mxu0 %v357
        %394 = vmatprep.subr.mxu0 0.0
        %395 = vmatpush1.msra.mxu0 %v358
        %396 = vmatprep.subr.mxu0 0.0
        %397 = vmatpush1.msra.mxu0 %v359
        %398 = vmatprep.subr.mxu0 0.0
        %399 = vmatpush1.msra.mxu0 0.0
        %400 = vmatprep.subr.mxu0 0.0
        %401 = vmatpush1.msra.mxu0 0.0
        %402 = vmatprep.subr.mxu0 0.0
        %403 = vmatpush1.msra.mxu0 0.0
        %404 = vmatprep.subr.mxu0 0.0
        %405 = vmatpush1.msra.mxu0 0.0
        %406 = vmatprep.subr.mxu0 0.0
        %407 = vmatpush1.msra.mxu0 0.0
        %408 = vmatprep.subr.mxu0 0.0
        %409 = vmatpush1.msra.mxu0 0.0
        %410 = vmatprep.subr.mxu0 0.0
        %411 = vmatpush1.msra.mxu0 0.0
        %412 = vmatprep.subr.mxu0 0.0
        %413 = vmatpush1.msra.mxu0 0.0
        %414 = vmatprep.subr.mxu0 0.0
        %415 = vmatpush1.msra.mxu0 0.0
        %416 = vmatprep.subr.mxu0 0.0
        %417 = vmatpush1.msra.mxu0 0.0
        %418 = vmatprep.subr.mxu0 0.0
        %419 = vmatpush1.msra.mxu0 0.0
        %420 = vmatprep.subr.mxu0 0.0
        %421 = vmatpush1.msra.mxu0 0.0
        %422 = vmatprep.subr.mxu0 0.0
        %423 = vmatpush1.msra.mxu0 0.0
        %424 = vmatprep.subr.mxu0 0.0
        %425 = vmatpush1.msra.mxu0 0.0
        %426 = vmatprep.subr.mxu0 0.0
        %427 = vmatpush1.msra.mxu0 0.0
        %428 = vmatprep.subr.mxu0 0.0
        %429 = vmatpush1.msra.mxu0 0.0
        %430 = vmatprep.mubr.f32.mxu0 0.0
        %431 = vmatmul.mubr.f32.gmra.mrb[0].mxu0 %v364
        %v432 = vpop.f32.mrb[0].mxu0
        %v433 = vadd.f32 0.0, %v432
        %v434 = vpop.f32.mrb[0].mxu0
        %435 = vdwg.mxu0
        %v436 = vadd.f32 %v365, %v433
        %v437 = vtanh.pop %v436
        %v439 = vlaneseq
        %v440 = vshrl.u32 %v439, 7
        %v441 = vsub.s32 0, %v440
        %v442 = vrot.slane %v362, %v441
        %v444 = vmul.f32 %v437, %v442
        %v445 = vxor.u32 %v444, 2147483648
        %v446 = vmul.f32 %v445, 1.442695
        %v447 = vpow.pop %v446
        %v448 = vadd.f32 %v447, 1.0
        %v449 = vrcp.pop %v448
        %v450 = vmul.f32 1.0, %v449
        %452 = vrot.lane.b32.xlu0 %v450, 112
        %v453 = vpop.permute.xlu0 %452
        %v455 = vadd.f32 %v450, %v453
        %v456 = vmul.f32 %v450, %v453
        %v457 = vmul.f32 %v456, 2.0
        %v458 = vsub.f32 %v455, %v457
        %v460 = vlaneseq
        %v461 = vshrl.u32 %v460, 7
        %v462 = vsub.s32 0, %v461
        %v463 = vrot.slane %v363, %v462
        %vm465 = vcmask 130048
        %v467 = vsel %vm465, %v458, 0
        %469 = vmatprep.subr.mxu0 0.0
        %470 = vmatpush1.msra.mxu0 %v360
        %471 = vmatprep.subr.mxu0 0.0
        %472 = vmatpush1.msra.mxu0 %v361
        %473 = vmatprep.subr.mxu0 0.0
        %474 = vmatpush1.msra.mxu0 0.0
        %475 = vmatprep.subr.mxu0 0.0
        %476 = vmatpush1.msra.mxu0 0.0
        %477 = vmatprep.subr.mxu0 0.0
        %478 = vmatpush1.msra.mxu0 0.0
        %479 = vmatprep.subr.mxu0 0.0
        %480 = vmatpush1.msra.mxu0 0.0
        %481 = vmatprep.subr.mxu0 0.0
        %482 = vmatpush1.msra.mxu0 0.0
        %483 = vmatprep.subr.mxu0 0.0
        %484 = vmatpush1.msra.mxu0 0.0
        %485 = vmatprep.subr.mxu0 0.0
        %486 = vmatpush1.msra.mxu0 0.0
        %487 = vmatprep.subr.mxu0 0.0
        %488 = vmatpush1.msra.mxu0 0.0
        %489 = vmatprep.subr.mxu0 0.0
        %490 = vmatpush1.msra.mxu0 0.0
        %491 = vmatprep.subr.mxu0 0.0
        %492 = vmatpush1.msra.mxu0 0.0
        %493 = vmatprep.subr.mxu0 0.0
        %494 = vmatpush1.msra.mxu0 0.0
        %495 = vmatprep.subr.mxu0 0.0
        %496 = vmatpush1.msra.mxu0 0.0
        %497 = vmatprep.subr.mxu0 0.0
        %498 = vmatpush1.msra.mxu0 0.0
        %499 = vmatprep.subr.mxu0 0.0
        %500 = vmatpush1.msra.mxu0 0.0
        %501 = vmatprep.subr.mxu0 0.0
        %502 = vmatpush1.msra.mxu0 0.0
        %503 = vmatprep.subr.mxu0 0.0
        %504 = vmatpush1.msra.mxu0 0.0
        %505 = vmatprep.subr.mxu0 0.0
        %506 = vmatpush1.msra.mxu0 0.0
        %507 = vmatprep.subr.mxu0 0.0
        %508 = vmatpush1.msra.mxu0 0.0
        %509 = vmatprep.subr.mxu0 0.0
        %510 = vmatpush1.msra.mxu0 0.0
        %511 = vmatprep.subr.mxu0 0.0
        %512 = vmatpush1.msra.mxu0 0.0
        %513 = vmatprep.subr.mxu0 0.0
        %514 = vmatpush1.msra.mxu0 0.0
        %515 = vmatprep.subr.mxu0 0.0
        %516 = vmatpush1.msra.mxu0 0.0
        %517 = vmatprep.subr.mxu0 0.0
        %518 = vmatpush1.msra.mxu0 0.0
        %519 = vmatprep.subr.mxu0 0.0
        %520 = vmatpush1.msra.mxu0 0.0
        %521 = vmatprep.subr.mxu0 0.0
        %522 = vmatpush1.msra.mxu0 0.0
        %523 = vmatprep.subr.mxu0 0.0
        %524 = vmatpush1.msra.mxu0 0.0
        %525 = vmatprep.subr.mxu0 0.0
        %526 = vmatpush1.msra.mxu0 0.0
        %527 = vmatprep.subr.mxu0 0.0
        %528 = vmatpush1.msra.mxu0 0.0
        %529 = vmatprep.subr.mxu0 0.0
        %530 = vmatpush1.msra.mxu0 0.0
        %531 = vmatprep.subr.mxu0 0.0
        %532 = vmatpush1.msra.mxu0 0.0
        %533 = vmatprep.mubr.f32.mxu0 0.0
        %534 = vmatmul.mubr.f32.gmra.mrb[0].mxu0 %v467
        %v535 = vpop.f32.mrb[0].mxu0
        %v536 = vadd.f32 %v463, %v535
        %v537 = vpop.f32.mrb[0].mxu0
        %538 = vdwg.mxu0
        %v539 = vadd.f32 %v444, %v536
        %540 = vst [vmem:[%s335] sm:$0xff] %v539
        %s541 = scalar_lea.vmem %s295, 8 [#allocation3]
        %v542 = vld [vmem:[%s541] sm:$0xff]
        %543 = vmatprep.subr.mxu0 0.0
        %544 = vmatpush1.msra.mxu0 %v344
        %545 = vmatprep.subr.mxu0 0.0
        %546 = vmatpush1.msra.mxu0 %v345
        %547 = vmatprep.subr.mxu0 0.0
        %548 = vmatpush1.msra.mxu0 %v346
        %549 = vmatprep.subr.mxu0 0.0
        %550 = vmatpush1.msra.mxu0 %v347
        %551 = vmatprep.subr.mxu0 0.0
        %552 = vmatpush1.msra.mxu0 %v348
        %553 = vmatprep.subr.mxu0 0.0
        %554 = vmatpush1.msra.mxu0 %v349
        %555 = vmatprep.subr.mxu0 0.0
        %556 = vmatpush1.msra.mxu0 %v350
        %557 = vmatprep.subr.mxu0 0.0
        %558 = vmatpush1.msra.mxu0 %v351
        %559 = vmatprep.subr.mxu0 0.0
        %560 = vmatpush1.msra.mxu0 %v352
        %561 = vmatprep.subr.mxu0 0.0
        %562 = vmatpush1.msra.mxu0 %v353
        %563 = vmatprep.subr.mxu0 0.0
        %564 = vmatpush1.msra.mxu0 %v354
        %565 = vmatprep.subr.mxu0 0.0
        %566 = vmatpush1.msra.mxu0 %v355
        %567 = vmatprep.subr.mxu0 0.0
        %568 = vmatpush1.msra.mxu0 %v356
        %569 = vmatprep.subr.mxu0 0.0
        %570 = vmatpush1.msra.mxu0 %v357
        %571 = vmatprep.subr.mxu0 0.0
        %572 = vmatpush1.msra.mxu0 %v358
        %573 = vmatprep.subr.mxu0 0.0
        %574 = vmatpush1.msra.mxu0 %v359
        %575 = vmatprep.subr.mxu0 0.0
        %576 = vmatpush1.msra.mxu0 0.0
        %577 = vmatprep.subr.mxu0 0.0
        %578 = vmatpush1.msra.mxu0 0.0
        %579 = vmatprep.subr.mxu0 0.0
        %580 = vmatpush1.msra.mxu0 0.0
        %581 = vmatprep.subr.mxu0 0.0
        %582 = vmatpush1.msra.mxu0 0.0
        %583 = vmatprep.subr.mxu0 0.0
        %584 = vmatpush1.msra.mxu0 0.0
        %585 = vmatprep.subr.mxu0 0.0
        %586 = vmatpush1.msra.mxu0 0.0
        %587 = vmatprep.subr.mxu0 0.0
        %588 = vmatpush1.msra.mxu0 0.0
        %589 = vmatprep.subr.mxu0 0.0
        %590 = vmatpush1.msra.mxu0 0.0
        %591 = vmatprep.subr.mxu0 0.0
        %592 = vmatpush1.msra.mxu0 0.0
        %593 = vmatprep.subr.mxu0 0.0
        %594 = vmatpush1.msra.mxu0 0.0
        %595 = vmatprep.subr.mxu0 0.0
        %596 = vmatpush1.msra.mxu0 0.0
        %597 = vmatprep.subr.mxu0 0.0
        %598 = vmatpush1.msra.mxu0 0.0
        %599 = vmatprep.subr.mxu0 0.0
        %600 = vmatpush1.msra.mxu0 0.0
        %601 = vmatprep.subr.mxu0 0.0
        %602 = vmatpush1.msra.mxu0 0.0
        %603 = vmatprep.subr.mxu0 0.0
        %604 = vmatpush1.msra.mxu0 0.0
        %605 = vmatprep.subr.mxu0 0.0
        %606 = vmatpush1.msra.mxu0 0.0
        %607 = vmatprep.mubr.f32.mxu0 0.0
        %608 = vmatmul.mubr.f32.gmra.mrb[0].mxu0 %v539
        %v609 = vpop.f32.mrb[0].mxu0
        %v610 = vadd.f32 0.0, %v609
        %v611 = vpop.f32.mrb[0].mxu0
        %612 = vdwg.mxu0
        %v613 = vadd.f32 %v542, %v610
        %v614 = vtanh.pop %v613
        %v615 = vmul.f32 %v614, %v442
        %v616 = vxor.u32 %v615, 2147483648
        %v617 = vmul.f32 %v616, 1.442695
        %v618 = vpow.pop %v617
        %v619 = vadd.f32 %v618, 1.0
        %v620 = vrcp.pop %v619
        %v621 = vmul.f32 1.0, %v620
        %623 = vrot.lane.b32.xlu0 %v621, 112
        %v624 = vpop.permute.xlu0 %623
        %v626 = vadd.f32 %v621, %v624
        %v627 = vmul.f32 %v621, %v624
        %v628 = vmul.f32 %v627, 2.0
        %v629 = vsub.f32 %v626, %v628
        %v631 = vsel %vm465, %v629, 0
        %633 = vmatprep.subr.mxu0 0.0
        %634 = vmatpush1.msra.mxu0 %v360
        %635 = vmatprep.subr.mxu0 0.0
        %636 = vmatpush1.msra.mxu0 %v361
        %637 = vmatprep.subr.mxu0 0.0
        %638 = vmatpush1.msra.mxu0 0.0
        %639 = vmatprep.subr.mxu0 0.0
        %640 = vmatpush1.msra.mxu0 0.0
        %641 = vmatprep.subr.mxu0 0.0
        %642 = vmatpush1.msra.mxu0 0.0
        %643 = vmatprep.subr.mxu0 0.0
        %644 = vmatpush1.msra.mxu0 0.0
        %645 = vmatprep.subr.mxu0 0.0
        %646 = vmatpush1.msra.mxu0 0.0
        %647 = vmatprep.subr.mxu0 0.0
        %648 = vmatpush1.msra.mxu0 0.0
        %649 = vmatprep.subr.mxu0 0.0
        %650 = vmatpush1.msra.mxu0 0.0
        %651 = vmatprep.subr.mxu0 0.0
        %652 = vmatpush1.msra.mxu0 0.0
        %653 = vmatprep.subr.mxu0 0.0
        %654 = vmatpush1.msra.mxu0 0.0
        %655 = vmatprep.subr.mxu0 0.0
        %656 = vmatpush1.msra.mxu0 0.0
        %657 = vmatprep.subr.mxu0 0.0
        %658 = vmatpush1.msra.mxu0 0.0
        %659 = vmatprep.subr.mxu0 0.0
        %660 = vmatpush1.msra.mxu0 0.0
        %661 = vmatprep.subr.mxu0 0.0
        %662 = vmatpush1.msra.mxu0 0.0
        %663 = vmatprep.subr.mxu0 0.0
        %664 = vmatpush1.msra.mxu0 0.0
        %665 = vmatprep.subr.mxu0 0.0
        %666 = vmatpush1.msra.mxu0 0.0
        %667 = vmatprep.subr.mxu0 0.0
        %668 = vmatpush1.msra.mxu0 0.0
        %669 = vmatprep.subr.mxu0 0.0
        %670 = vmatpush1.msra.mxu0 0.0
        %671 = vmatprep.subr.mxu0 0.0
        %672 = vmatpush1.msra.mxu0 0.0
        %673 = vmatprep.subr.mxu0 0.0
        %674 = vmatpush1.msra.mxu0 0.0
        %675 = vmatprep.subr.mxu0 0.0
        %676 = vmatpush1.msra.mxu0 0.0
        %677 = vmatprep.subr.mxu0 0.0
        %678 = vmatpush1.msra.mxu0 0.0
        %679 = vmatprep.subr.mxu0 0.0
        %680 = vmatpush1.msra.mxu0 0.0
        %681 = vmatprep.subr.mxu0 0.0
        %682 = vmatpush1.msra.mxu0 0.0
        %683 = vmatprep.subr.mxu0 0.0
        %684 = vmatpush1.msra.mxu0 0.0
        %685 = vmatprep.subr.mxu0 0.0
        %686 = vmatpush1.msra.mxu0 0.0
        %687 = vmatprep.subr.mxu0 0.0
        %688 = vmatpush1.msra.mxu0 0.0
        %689 = vmatprep.subr.mxu0 0.0
        %690 = vmatpush1.msra.mxu0 0.0
        %691 = vmatprep.subr.mxu0 0.0
        %692 = vmatpush1.msra.mxu0 0.0
        %693 = vmatprep.subr.mxu0 0.0
        %694 = vmatpush1.msra.mxu0 0.0
        %695 = vmatprep.subr.mxu0 0.0
        %696 = vmatpush1.msra.mxu0 0.0
        %697 = vmatprep.mubr.f32.mxu0 0.0
        %698 = vmatmul.mubr.f32.gmra.mrb[0].mxu0 %v631
        %v699 = vpop.f32.mrb[0].mxu0
        %v700 = vadd.f32 %v463, %v699
        %v701 = vpop.f32.mrb[0].mxu0
        %702 = vdwg.mxu0
        %v703 = vadd.f32 %v615, %v700
        %s704 = scalar_lea.vmem %s335, 8 [#allocation11]
        %705 = vst [vmem:[%s704] sm:$0xff] %v703
        %s706 = scalar_lea.vmem %s295, 16 [#allocation3]
        %v707 = vld [vmem:[%s706] sm:$0xff]
        %708 = vmatprep.subr.mxu0 0.0
        %709 = vmatpush1.msra.mxu0 %v344
        %710 = vmatprep.subr.mxu0 0.0
        %711 = vmatpush1.msra.mxu0 %v345
        %712 = vmatprep.subr.mxu0 0.0
        %713 = vmatpush1.msra.mxu0 %v346
        %714 = vmatprep.subr.mxu0 0.0
        %715 = vmatpush1.msra.mxu0 %v347
        %716 = vmatprep.subr.mxu0 0.0
        %717 = vmatpush1.msra.mxu0 %v348
        %718 = vmatprep.subr.mxu0 0.0
        %719 = vmatpush1.msra.mxu0 %v349
        %720 = vmatprep.subr.mxu0 0.0
        %721 = vmatpush1.msra.mxu0 %v350
        %722 = vmatprep.subr.mxu0 0.0
        %723 = vmatpush1.msra.mxu0 %v351
        %724 = vmatprep.subr.mxu0 0.0
        %725 = vmatpush1.msra.mxu0 %v352
        %726 = vmatprep.subr.mxu0 0.0
        %727 = vmatpush1.msra.mxu0 %v353
        %728 = vmatprep.subr.mxu0 0.0
        %729 = vmatpush1.msra.mxu0 %v354
        %730 = vmatprep.subr.mxu0 0.0
        %731 = vmatpush1.msra.mxu0 %v355
        %732 = vmatprep.subr.mxu0 0.0
        %733 = vmatpush1.msra.mxu0 %v356
        %734 = vmatprep.subr.mxu0 0.0
        %735 = vmatpush1.msra.mxu0 %v357
        %736 = vmatprep.subr.mxu0 0.0
        %737 = vmatpush1.msra.mxu0 %v358
        %738 = vmatprep.subr.mxu0 0.0
        %739 = vmatpush1.msra.mxu0 %v359
        %740 = vmatprep.subr.mxu0 0.0
        %741 = vmatpush1.msra.mxu0 0.0
        %742 = vmatprep.subr.mxu0 0.0
        %743 = vmatpush1.msra.mxu0 0.0
        %744 = vmatprep.subr.mxu0 0.0
        %745 = vmatpush1.msra.mxu0 0.0
        %746 = vmatprep.subr.mxu0 0.0
        %747 = vmatpush1.msra.mxu0 0.0
        %748 = vmatprep.subr.mxu0 0.0
        %749 = vmatpush1.msra.mxu0 0.0
        %750 = vmatprep.subr.mxu0 0.0
        %751 = vmatpush1.msra.mxu0 0.0
        %752 = vmatprep.subr.mxu0 0.0
        %753 = vmatpush1.msra.mxu0 0.0
        %754 = vmatprep.subr.mxu0 0.0
        %755 = vmatpush1.msra.mxu0 0.0
        %756 = vmatprep.subr.mxu0 0.0
        %757 = vmatpush1.msra.mxu0 0.0
        %758 = vmatprep.subr.mxu0 0.0
        %759 = vmatpush1.msra.mxu0 0.0
        %760 = vmatprep.subr.mxu0 0.0
        %761 = vmatpush1.msra.mxu0 0.0
        %762 = vmatprep.subr.mxu0 0.0
        %763 = vmatpush1.msra.mxu0 0.0
        %764 = vmatprep.subr.mxu0 0.0
        %765 = vmatpush1.msra.mxu0 0.0
        %766 = vmatprep.subr.mxu0 0.0
        %767 = vmatpush1.msra.mxu0 0.0
        %768 = vmatprep.subr.mxu0 0.0
        %769 = vmatpush1.msra.mxu0 0.0
        %770 = vmatprep.subr.mxu0 0.0
        %771 = vmatpush1.msra.mxu0 0.0
        %772 = vmatprep.mubr.f32.mxu0 0.0
        %773 = vmatmul.mubr.f32.gmra.mrb[0].mxu0 %v703
        %v774 = vpop.f32.mrb[0].mxu0
        %v775 = vadd.f32 0.0, %v774
        %v776 = vpop.f32.mrb[0].mxu0
        %777 = vdwg.mxu0
        %v778 = vadd.f32 %v707, %v775
        %v779 = vtanh.pop %v778
        %v780 = vmul.f32 %v779, %v442
        %v781 = vxor.u32 %v780, 2147483648
        %v782 = vmul.f32 %v781, 1.442695
        %v783 = vpow.pop %v782
        %v784 = vadd.f32 %v783, 1.0
        %v785 = vrcp.pop %v784
        %v786 = vmul.f32 1.0, %v785
        %788 = vrot.lane.b32.xlu0 %v786, 112
        %v789 = vpop.permute.xlu0 %788
        %v791 = vadd.f32 %v786, %v789
        %v792 = vmul.f32 %v786, %v789
        %v793 = vmul.f32 %v792, 2.0
        %v794 = vsub.f32 %v791, %v793
        %v796 = vsel %vm465, %v794, 0
        %798 = vmatprep.subr.mxu0 0.0
        %799 = vmatpush1.msra.mxu0 %v360
        %800 = vmatprep.subr.mxu0 0.0
        %801 = vmatpush1.msra.mxu0 %v361
        %802 = vmatprep.subr.mxu0 0.0
        %803 = vmatpush1.msra.mxu0 0.0
        %804 = vmatprep.subr.mxu0 0.0
        %805 = vmatpush1.msra.mxu0 0.0
        %806 = vmatprep.subr.mxu0 0.0
        %807 = vmatpush1.msra.mxu0 0.0
        %808 = vmatprep.subr.mxu0 0.0
        %809 = vmatpush1.msra.mxu0 0.0
        %810 = vmatprep.subr.mxu0 0.0
        %811 = vmatpush1.msra.mxu0 0.0
        %812 = vmatprep.subr.mxu0 0.0
        %813 = vmatpush1.msra.mxu0 0.0
        %814 = vmatprep.subr.mxu0 0.0
        %815 = vmatpush1.msra.mxu0 0.0
        %816 = vmatprep.subr.mxu0 0.0
        %817 = vmatpush1.msra.mxu0 0.0
        %818 = vmatprep.subr.mxu0 0.0
        %819 = vmatpush1.msra.mxu0 0.0
        %820 = vmatprep.subr.mxu0 0.0
        %821 = vmatpush1.msra.mxu0 0.0
        %822 = vmatprep.subr.mxu0 0.0
        %823 = vmatpush1.msra.mxu0 0.0
        %824 = vmatprep.subr.mxu0 0.0
        %825 = vmatpush1.msra.mxu0 0.0
        %826 = vmatprep.subr.mxu0 0.0
        %827 = vmatpush1.msra.mxu0 0.0
        %828 = vmatprep.subr.mxu0 0.0
        %829 = vmatpush1.msra.mxu0 0.0
        %830 = vmatprep.subr.mxu0 0.0
        %831 = vmatpush1.msra.mxu0 0.0
        %832 = vmatprep.subr.mxu0 0.0
        %833 = vmatpush1.msra.mxu0 0.0
        %834 = vmatprep.subr.mxu0 0.0
        %835 = vmatpush1.msra.mxu0 0.0
        %836 = vmatprep.subr.mxu0 0.0
        %837 = vmatpush1.msra.mxu0 0.0
        %838 = vmatprep.subr.mxu0 0.0
        %839 = vmatpush1.msra.mxu0 0.0
        %840 = vmatprep.subr.mxu0 0.0
        %841 = vmatpush1.msra.mxu0 0.0
        %842 = vmatprep.subr.mxu0 0.0
        %843 = vmatpush1.msra.mxu0 0.0
        %844 = vmatprep.subr.mxu0 0.0
        %845 = vmatpush1.msra.mxu0 0.0
        %846 = vmatprep.subr.mxu0 0.0
        %847 = vmatpush1.msra.mxu0 0.0
        %848 = vmatprep.subr.mxu0 0.0
        %849 = vmatpush1.msra.mxu0 0.0
        %850 = vmatprep.subr.mxu0 0.0
        %851 = vmatpush1.msra.mxu0 0.0
        %852 = vmatprep.subr.mxu0 0.0
        %853 = vmatpush1.msra.mxu0 0.0
        %854 = vmatprep.subr.mxu0 0.0
        %855 = vmatpush1.msra.mxu0 0.0
        %856 = vmatprep.subr.mxu0 0.0
        %857 = vmatpush1.msra.mxu0 0.0
        %858 = vmatprep.subr.mxu0 0.0
        %859 = vmatpush1.msra.mxu0 0.0
        %860 = vmatprep.subr.mxu0 0.0
        %861 = vmatpush1.msra.mxu0 0.0
        %862 = vmatprep.mubr.f32.mxu0 0.0
        %863 = vmatmul.mubr.f32.gmra.mrb[0].mxu0 %v796
        %v864 = vpop.f32.mrb[0].mxu0
        %v865 = vadd.f32 %v463, %v864
        %v866 = vpop.f32.mrb[0].mxu0
        %867 = vdwg.mxu0
        %v868 = vadd.f32 %v780, %v865
        %s869 = scalar_lea.vmem %s335, 16 [#allocation11]
        %870 = vst [vmem:[%s869] sm:$0xff] %v868
        %s871 = scalar_lea.vmem %s295, 24 [#allocation3]
        %v872 = vld [vmem:[%s871] sm:$0xff]
        %873 = vmatprep.subr.mxu0 0.0
        %874 = vmatpush1.msra.mxu0 %v344
        %875 = vmatprep.subr.mxu0 0.0
        %876 = vmatpush1.msra.mxu0 %v345
        %877 = vmatprep.subr.mxu0 0.0
        %878 = vmatpush1.msra.mxu0 %v346
        %879 = vmatprep.subr.mxu0 0.0
        %880 = vmatpush1.msra.mxu0 %v347
        %881 = vmatprep.subr.mxu0 0.0
        %882 = vmatpush1.msra.mxu0 %v348
        %883 = vmatprep.subr.mxu0 0.0
        %884 = vmatpush1.msra.mxu0 %v349
        %885 = vmatprep.subr.mxu0 0.0
        %886 = vmatpush1.msra.mxu0 %v350
        %887 = vmatprep.subr.mxu0 0.0
        %888 = vmatpush1.msra.mxu0 %v351
        %889 = vmatprep.subr.mxu0 0.0
        %890 = vmatpush1.msra.mxu0 %v352
        %891 = vmatprep.subr.mxu0 0.0
        %892 = vmatpush1.msra.mxu0 %v353
        %893 = vmatprep.subr.mxu0 0.0
        %894 = vmatpush1.msra.mxu0 %v354
        %895 = vmatprep.subr.mxu0 0.0
        %896 = vmatpush1.msra.mxu0 %v355
        %897 = vmatprep.subr.mxu0 0.0
        %898 = vmatpush1.msra.mxu0 %v356
        %899 = vmatprep.subr.mxu0 0.0
        %900 = vmatpush1.msra.mxu0 %v357
        %901 = vmatprep.subr.mxu0 0.0
        %902 = vmatpush1.msra.mxu0 %v358
        %903 = vmatprep.subr.mxu0 0.0
        %904 = vmatpush1.msra.mxu0 %v359
        %905 = vmatprep.subr.mxu0 0.0
        %906 = vmatpush1.msra.mxu0 0.0
        %907 = vmatprep.subr.mxu0 0.0
        %908 = vmatpush1.msra.mxu0 0.0
        %909 = vmatprep.subr.mxu0 0.0
        %910 = vmatpush1.msra.mxu0 0.0
        %911 = vmatprep.subr.mxu0 0.0
        %912 = vmatpush1.msra.mxu0 0.0
        %913 = vmatprep.subr.mxu0 0.0
        %914 = vmatpush1.msra.mxu0 0.0
        %915 = vmatprep.subr.mxu0 0.0
        %916 = vmatpush1.msra.mxu0 0.0
        %917 = vmatprep.subr.mxu0 0.0
        %918 = vmatpush1.msra.mxu0 0.0
        %919 = vmatprep.subr.mxu0 0.0
        %920 = vmatpush1.msra.mxu0 0.0
        %921 = vmatprep.subr.mxu0 0.0
        %922 = vmatpush1.msra.mxu0 0.0
        %923 = vmatprep.subr.mxu0 0.0
        %924 = vmatpush1.msra.mxu0 0.0
        %925 = vmatprep.subr.mxu0 0.0
        %926 = vmatpush1.msra.mxu0 0.0
        %927 = vmatprep.subr.mxu0 0.0
        %928 = vmatpush1.msra.mxu0 0.0
        %929 = vmatprep.subr.mxu0 0.0
        %930 = vmatpush1.msra.mxu0 0.0
        %931 = vmatprep.subr.mxu0 0.0
        %932 = vmatpush1.msra.mxu0 0.0
        %933 = vmatprep.subr.mxu0 0.0
        %934 = vmatpush1.msra.mxu0 0.0
        %935 = vmatprep.subr.mxu0 0.0
        %936 = vmatpush1.msra.mxu0 0.0
        %937 = vmatprep.mubr.f32.mxu0 0.0
        %938 = vmatmul.mubr.f32.gmra.mrb[0].mxu0 %v868
        %v939 = vpop.f32.mrb[0].mxu0
        %v940 = vadd.f32 0.0, %v939
        %v941 = vpop.f32.mrb[0].mxu0
        %942 = vdwg.mxu0
        %v943 = vadd.f32 %v872, %v940
        %v944 = vtanh.pop %v943
        %v945 = vmul.f32 %v944, %v442
        %v946 = vxor.u32 %v945, 2147483648
        %v947 = vmul.f32 %v946, 1.442695
        %v948 = vpow.pop %v947
        %v949 = vadd.f32 %v948, 1.0
        %v950 = vrcp.pop %v949
        %v951 = vmul.f32 1.0, %v950
        %953 = vrot.lane.b32.xlu0 %v951, 112
        %v954 = vpop.permute.xlu0 %953
        %v956 = vadd.f32 %v951, %v954
        %v957 = vmul.f32 %v951, %v954
        %v958 = vmul.f32 %v957, 2.0
        %v959 = vsub.f32 %v956, %v958
        %v961 = vsel %vm465, %v959, 0
        %963 = vmatprep.subr.mxu0 0.0
        %964 = vmatpush1.msra.mxu0 %v360
        %965 = vmatprep.subr.mxu0 0.0
        %966 = vmatpush1.msra.mxu0 %v361
        %967 = vmatprep.subr.mxu0 0.0
        %968 = vmatpush1.msra.mxu0 0.0
        %969 = vmatprep.subr.mxu0 0.0
        %970 = vmatpush1.msra.mxu0 0.0
        %971 = vmatprep.subr.mxu0 0.0
        %972 = vmatpush1.msra.mxu0 0.0
        %973 = vmatprep.subr.mxu0 0.0
        %974 = vmatpush1.msra.mxu0 0.0
        %975 = vmatprep.subr.mxu0 0.0
        %976 = vmatpush1.msra.mxu0 0.0
        %977 = vmatprep.subr.mxu0 0.0
        %978 = vmatpush1.msra.mxu0 0.0
        %979 = vmatprep.subr.mxu0 0.0
        %980 = vmatpush1.msra.mxu0 0.0
        %981 = vmatprep.subr.mxu0 0.0
        %982 = vmatpush1.msra.mxu0 0.0
        %983 = vmatprep.subr.mxu0 0.0
        %984 = vmatpush1.msra.mxu0 0.0
        %985 = vmatprep.subr.mxu0 0.0
        %986 = vmatpush1.msra.mxu0 0.0
        %987 = vmatprep.subr.mxu0 0.0
        %988 = vmatpush1.msra.mxu0 0.0
        %989 = vmatprep.subr.mxu0 0.0
        %990 = vmatpush1.msra.mxu0 0.0
        %991 = vmatprep.subr.mxu0 0.0
        %992 = vmatpush1.msra.mxu0 0.0
        %993 = vmatprep.subr.mxu0 0.0
        %994 = vmatpush1.msra.mxu0 0.0
        %995 = vmatprep.subr.mxu0 0.0
        %996 = vmatpush1.msra.mxu0 0.0
        %997 = vmatprep.subr.mxu0 0.0
        %998 = vmatpush1.msra.mxu0 0.0
        %999 = vmatprep.subr.mxu0 0.0
        %1000 = vmatpush1.msra.mxu0 0.0
        %1001 = vmatprep.subr.mxu0 0.0
        %1002 = vmatpush1.msra.mxu0 0.0
        %1003 = vmatprep.subr.mxu0 0.0
        %1004 = vmatpush1.msra.mxu0 0.0
        %1005 = vmatprep.subr.mxu0 0.0
        %1006 = vmatpush1.msra.mxu0 0.0
        %1007 = vmatprep.subr.mxu0 0.0
        %1008 = vmatpush1.msra.mxu0 0.0
        %1009 = vmatprep.subr.mxu0 0.0
        %1010 = vmatpush1.msra.mxu0 0.0
        %1011 = vmatprep.subr.mxu0 0.0
        %1012 = vmatpush1.msra.mxu0 0.0
        %1013 = vmatprep.subr.mxu0 0.0
        %1014 = vmatpush1.msra.mxu0 0.0
        %1015 = vmatprep.subr.mxu0 0.0
        %1016 = vmatpush1.msra.mxu0 0.0
        %1017 = vmatprep.subr.mxu0 0.0
        %1018 = vmatpush1.msra.mxu0 0.0
        %1019 = vmatprep.subr.mxu0 0.0
        %1020 = vmatpush1.msra.mxu0 0.0
        %1021 = vmatprep.subr.mxu0 0.0
        %1022 = vmatpush1.msra.mxu0 0.0
        %1023 = vmatprep.subr.mxu0 0.0
        %1024 = vmatpush1.msra.mxu0 0.0
        %1025 = vmatprep.subr.mxu0 0.0
        %1026 = vmatpush1.msra.mxu0 0.0
        %1027 = vmatprep.mubr.f32.mxu0 0.0
        %1028 = vmatmul.mubr.f32.gmra.mrb[0].mxu0 %v961
        %v1029 = vpop.f32.mrb[0].mxu0
        %v1030 = vadd.f32 %v463, %v1029
        %v1031 = vpop.f32.mrb[0].mxu0
        %1032 = vdwg.mxu0
        %v1033 = vadd.f32 %v945, %v1030
        %s1034 = scalar_lea.vmem %s335, 24 [#allocation11]
        %1035 = vst [vmem:[%s1034] sm:$0xff] %v1033
        %s1036 = scalar_lea.vmem %s295, 32 [#allocation3]
        %v1037 = vld [vmem:[%s1036] sm:$0xff]
        %1038 = vmatprep.subr.mxu0 0.0
        %1039 = vmatpush1.msra.mxu0 %v344
        %1040 = vmatprep.subr.mxu0 0.0
        %1041 = vmatpush1.msra.mxu0 %v345
        %1042 = vmatprep.subr.mxu0 0.0
        %1043 = vmatpush1.msra.mxu0 %v346
        %1044 = vmatprep.subr.mxu0 0.0
        %1045 = vmatpush1.msra.mxu0 %v347
        %1046 = vmatprep.subr.mxu0 0.0
        %1047 = vmatpush1.msra.mxu0 %v348
        %1048 = vmatprep.subr.mxu0 0.0
        %1049 = vmatpush1.msra.mxu0 %v349
        %1050 = vmatprep.subr.mxu0 0.0
        %1051 = vmatpush1.msra.mxu0 %v350
        %1052 = vmatprep.subr.mxu0 0.0
        %1053 = vmatpush1.msra.mxu0 %v351
        %1054 = vmatprep.subr.mxu0 0.0
        %1055 = vmatpush1.msra.mxu0 %v352
        %1056 = vmatprep.subr.mxu0 0.0
        %1057 = vmatpush1.msra.mxu0 %v353
        %1058 = vmatprep.subr.mxu0 0.0
        %1059 = vmatpush1.msra.mxu0 %v354
        %1060 = vmatprep.subr.mxu0 0.0
        %1061 = vmatpush1.msra.mxu0 %v355
        %1062 = vmatprep.subr.mxu0 0.0
        %1063 = vmatpush1.msra.mxu0 %v356
        %1064 = vmatprep.subr.mxu0 0.0
        %1065 = vmatpush1.msra.mxu0 %v357
        %1066 = vmatprep.subr.mxu0 0.0
        %1067 = vmatpush1.msra.mxu0 %v358
        %1068 = vmatprep.subr.mxu0 0.0
        %1069 = vmatpush1.msra.mxu0 %v359
        %1070 = vmatprep.subr.mxu0 0.0
        %1071 = vmatpush1.msra.mxu0 0.0
        %1072 = vmatprep.subr.mxu0 0.0
        %1073 = vmatpush1.msra.mxu0 0.0
        %1074 = vmatprep.subr.mxu0 0.0
        %1075 = vmatpush1.msra.mxu0 0.0
        %1076 = vmatprep.subr.mxu0 0.0
        %1077 = vmatpush1.msra.mxu0 0.0
        %1078 = vmatprep.subr.mxu0 0.0
        %1079 = vmatpush1.msra.mxu0 0.0
        %1080 = vmatprep.subr.mxu0 0.0
        %1081 = vmatpush1.msra.mxu0 0.0
        %1082 = vmatprep.subr.mxu0 0.0
        %1083 = vmatpush1.msra.mxu0 0.0
        %1084 = vmatprep.subr.mxu0 0.0
        %1085 = vmatpush1.msra.mxu0 0.0
        %1086 = vmatprep.subr.mxu0 0.0
        %1087 = vmatpush1.msra.mxu0 0.0
        %1088 = vmatprep.subr.mxu0 0.0
        %1089 = vmatpush1.msra.mxu0 0.0
        %1090 = vmatprep.subr.mxu0 0.0
        %1091 = vmatpush1.msra.mxu0 0.0
        %1092 = vmatprep.subr.mxu0 0.0
        %1093 = vmatpush1.msra.mxu0 0.0
        %1094 = vmatprep.subr.mxu0 0.0
        %1095 = vmatpush1.msra.mxu0 0.0
        %1096 = vmatprep.subr.mxu0 0.0
        %1097 = vmatpush1.msra.mxu0 0.0
        %1098 = vmatprep.subr.mxu0 0.0
        %1099 = vmatpush1.msra.mxu0 0.0
        %1100 = vmatprep.subr.mxu0 0.0
        %1101 = vmatpush1.msra.mxu0 0.0
        %1102 = vmatprep.mubr.f32.mxu0 0.0
        %1103 = vmatmul.mubr.f32.gmra.mrb[0].mxu0 %v1033
        %v1104 = vpop.f32.mrb[0].mxu0
        %v1105 = vadd.f32 0.0, %v1104
        %v1106 = vpop.f32.mrb[0].mxu0
        %1107 = vdwg.mxu0
        %v1108 = vadd.f32 %v1037, %v1105
        %v1109 = vtanh.pop %v1108
        %v1110 = vmul.f32 %v1109, %v442
        %v1111 = vxor.u32 %v1110, 2147483648
        %v1112 = vmul.f32 %v1111, 1.442695
        %v1113 = vpow.pop %v1112
        %v1114 = vadd.f32 %v1113, 1.0
        %v1115 = vrcp.pop %v1114
        %v1116 = vmul.f32 1.0, %v1115
        %1118 = vrot.lane.b32.xlu0 %v1116, 112
        %v1119 = vpop.permute.xlu0 %1118
        %v1121 = vadd.f32 %v1116, %v1119
        %v1122 = vmul.f32 %v1116, %v1119
        %v1123 = vmul.f32 %v1122, 2.0
        %v1124 = vsub.f32 %v1121, %v1123
        %v1126 = vsel %vm465, %v1124, 0
        %1128 = vmatprep.subr.mxu0 0.0
        %1129 = vmatpush1.msra.mxu0 %v360
        %1130 = vmatprep.subr.mxu0 0.0
        %1131 = vmatpush1.msra.mxu0 %v361
        %1132 = vmatprep.subr.mxu0 0.0
        %1133 = vmatpush1.msra.mxu0 0.0
        %1134 = vmatprep.subr.mxu0 0.0
        %1135 = vmatpush1.msra.mxu0 0.0
        %1136 = vmatprep.subr.mxu0 0.0
        %1137 = vmatpush1.msra.mxu0 0.0
        %1138 = vmatprep.subr.mxu0 0.0
        %1139 = vmatpush1.msra.mxu0 0.0
        %1140 = vmatprep.subr.mxu0 0.0
        %1141 = vmatpush1.msra.mxu0 0.0
        %1142 = vmatprep.subr.mxu0 0.0
        %1143 = vmatpush1.msra.mxu0 0.0
        %1144 = vmatprep.subr.mxu0 0.0
        %1145 = vmatpush1.msra.mxu0 0.0
        %1146 = vmatprep.subr.mxu0 0.0
        %1147 = vmatpush1.msra.mxu0 0.0
        %1148 = vmatprep.subr.mxu0 0.0
        %1149 = vmatpush1.msra.mxu0 0.0
        %1150 = vmatprep.subr.mxu0 0.0
        %1151 = vmatpush1.msra.mxu0 0.0
        %1152 = vmatprep.subr.mxu0 0.0
        %1153 = vmatpush1.msra.mxu0 0.0
        %1154 = vmatprep.subr.mxu0 0.0
        %1155 = vmatpush1.msra.mxu0 0.0
        %1156 = vmatprep.subr.mxu0 0.0
        %1157 = vmatpush1.msra.mxu0 0.0
        %1158 = vmatprep.subr.mxu0 0.0
        %1159 = vmatpush1.msra.mxu0 0.0
        %1160 = vmatprep.subr.mxu0 0.0
        %1161 = vmatpush1.msra.mxu0 0.0
        %1162 = vmatprep.subr.mxu0 0.0
        %1163 = vmatpush1.msra.mxu0 0.0
        %1164 = vmatprep.subr.mxu0 0.0
        %1165 = vmatpush1.msra.mxu0 0.0
        %1166 = vmatprep.subr.mxu0 0.0
        %1167 = vmatpush1.msra.mxu0 0.0
        %1168 = vmatprep.subr.mxu0 0.0
        %1169 = vmatpush1.msra.mxu0 0.0
        %1170 = vmatprep.subr.mxu0 0.0
        %1171 = vmatpush1.msra.mxu0 0.0
        %1172 = vmatprep.subr.mxu0 0.0
        %1173 = vmatpush1.msra.mxu0 0.0
        %1174 = vmatprep.subr.mxu0 0.0
        %1175 = vmatpush1.msra.mxu0 0.0
        %1176 = vmatprep.subr.mxu0 0.0
        %1177 = vmatpush1.msra.mxu0 0.0
        %1178 = vmatprep.subr.mxu0 0.0
        %1179 = vmatpush1.msra.mxu0 0.0
        %1180 = vmatprep.subr.mxu0 0.0
        %1181 = vmatpush1.msra.mxu0 0.0
        %1182 = vmatprep.subr.mxu0 0.0
        %1183 = vmatpush1.msra.mxu0 0.0
        %1184 = vmatprep.subr.mxu0 0.0
        %1185 = vmatpush1.msra.mxu0 0.0
        %1186 = vmatprep.subr.mxu0 0.0
        %1187 = vmatpush1.msra.mxu0 0.0
        %1188 = vmatprep.subr.mxu0 0.0
        %1189 = vmatpush1.msra.mxu0 0.0
        %1190 = vmatprep.subr.mxu0 0.0
        %1191 = vmatpush1.msra.mxu0 0.0
        %1192 = vmatprep.mubr.f32.mxu0 0.0
        %1193 = vmatmul.mubr.f32.gmra.mrb[0].mxu0 %v1126
        %v1194 = vpop.f32.mrb[0].mxu0
        %v1195 = vadd.f32 %v463, %v1194
        %v1196 = vpop.f32.mrb[0].mxu0
        %1197 = vdwg.mxu0
        %v1198 = vadd.f32 %v1110, %v1195
        %s1199 = scalar_lea.vmem %s335, 32 [#allocation11]
        %1200 = vst [vmem:[%s1199] sm:$0xff] %v1198
        %s1201 = scalar_lea.vmem %s295, 40 [#allocation3]
        %v1202 = vld [vmem:[%s1201] sm:$0xff]
        %1203 = vmatprep.subr.mxu0 0.0
        %1204 = vmatpush1.msra.mxu0 %v344
        %1205 = vmatprep.subr.mxu0 0.0
        %1206 = vmatpush1.msra.mxu0 %v345
        %1207 = vmatprep.subr.mxu0 0.0
        %1208 = vmatpush1.msra.mxu0 %v346
        %1209 = vmatprep.subr.mxu0 0.0
        %1210 = vmatpush1.msra.mxu0 %v347
        %1211 = vmatprep.subr.mxu0 0.0
        %1212 = vmatpush1.msra.mxu0 %v348
        %1213 = vmatprep.subr.mxu0 0.0
        %1214 = vmatpush1.msra.mxu0 %v349
        %1215 = vmatprep.subr.mxu0 0.0
        %1216 = vmatpush1.msra.mxu0 %v350
        %1217 = vmatprep.subr.mxu0 0.0
        %1218 = vmatpush1.msra.mxu0 %v351
        %1219 = vmatprep.subr.mxu0 0.0
        %1220 = vmatpush1.msra.mxu0 %v352
        %1221 = vmatprep.subr.mxu0 0.0
        %1222 = vmatpush1.msra.mxu0 %v353
        %1223 = vmatprep.subr.mxu0 0.0
        %1224 = vmatpush1.msra.mxu0 %v354
        %1225 = vmatprep.subr.mxu0 0.0
        %1226 = vmatpush1.msra.mxu0 %v355
        %1227 = vmatprep.subr.mxu0 0.0
        %1228 = vmatpush1.msra.mxu0 %v356
        %1229 = vmatprep.subr.mxu0 0.0
        %1230 = vmatpush1.msra.mxu0 %v357
        %1231 = vmatprep.subr.mxu0 0.0
        %1232 = vmatpush1.msra.mxu0 %v358
        %1233 = vmatprep.subr.mxu0 0.0
        %1234 = vmatpush1.msra.mxu0 %v359
        %1235 = vmatprep.subr.mxu0 0.0
        %1236 = vmatpush1.msra.mxu0 0.0
        %1237 = vmatprep.subr.mxu0 0.0
        %1238 = vmatpush1.msra.mxu0 0.0
        %1239 = vmatprep.subr.mxu0 0.0
        %1240 = vmatpush1.msra.mxu0 0.0
        %1241 = vmatprep.subr.mxu0 0.0
        %1242 = vmatpush1.msra.mxu0 0.0
        %1243 = vmatprep.subr.mxu0 0.0
        %1244 = vmatpush1.msra.mxu0 0.0
        %1245 = vmatprep.subr.mxu0 0.0
        %1246 = vmatpush1.msra.mxu0 0.0
        %1247 = vmatprep.subr.mxu0 0.0
        %1248 = vmatpush1.msra.mxu0 0.0
        %1249 = vmatprep.subr.mxu0 0.0
        %1250 = vmatpush1.msra.mxu0 0.0
        %1251 = vmatprep.subr.mxu0 0.0
        %1252 = vmatpush1.msra.mxu0 0.0
        %1253 = vmatprep.subr.mxu0 0.0
        %1254 = vmatpush1.msra.mxu0 0.0
        %1255 = vmatprep.subr.mxu0 0.0
        %1256 = vmatpush1.msra.mxu0 0.0
        %1257 = vmatprep.subr.mxu0 0.0
        %1258 = vmatpush1.msra.mxu0 0.0
        %1259 = vmatprep.subr.mxu0 0.0
        %1260 = vmatpush1.msra.mxu0 0.0
        %1261 = vmatprep.subr.mxu0 0.0
        %1262 = vmatpush1.msra.mxu0 0.0
        %1263 = vmatprep.subr.mxu0 0.0
        %1264 = vmatpush1.msra.mxu0 0.0
        %1265 = vmatprep.subr.mxu0 0.0
        %1266 = vmatpush1.msra.mxu0 0.0
        %1267 = vmatprep.mubr.f32.mxu0 0.0
        %1268 = vmatmul.mubr.f32.gmra.mrb[0].mxu0 %v1198
        %v1269 = vpop.f32.mrb[0].mxu0
        %v1270 = vadd.f32 0.0, %v1269
        %v1271 = vpop.f32.mrb[0].mxu0
        %1272 = vdwg.mxu0
        %v1273 = vadd.f32 %v1202, %v1270
        %v1274 = vtanh.pop %v1273
        %v1275 = vmul.f32 %v1274, %v442
        %v1276 = vxor.u32 %v1275, 2147483648
        %v1277 = vmul.f32 %v1276, 1.442695
        %v1278 = vpow.pop %v1277
        %v1279 = vadd.f32 %v1278, 1.0
        %v1280 = vrcp.pop %v1279
        %v1281 = vmul.f32 1.0, %v1280
        %1283 = vrot.lane.b32.xlu0 %v1281, 112
        %v1284 = vpop.permute.xlu0 %1283
        %v1286 = vadd.f32 %v1281, %v1284
        %v1287 = vmul.f32 %v1281, %v1284
        %v1288 = vmul.f32 %v1287, 2.0
        %v1289 = vsub.f32 %v1286, %v1288
        %v1291 = vsel %vm465, %v1289, 0
        %1293 = vmatprep.subr.mxu0 0.0
        %1294 = vmatpush1.msra.mxu0 %v360
        %1295 = vmatprep.subr.mxu0 0.0
        %1296 = vmatpush1.msra.mxu0 %v361
        %1297 = vmatprep.subr.mxu0 0.0
        %1298 = vmatpush1.msra.mxu0 0.0
        %1299 = vmatprep.subr.mxu0 0.0
        %1300 = vmatpush1.msra.mxu0 0.0
        %1301 = vmatprep.subr.mxu0 0.0
        %1302 = vmatpush1.msra.mxu0 0.0
        %1303 = vmatprep.subr.mxu0 0.0
        %1304 = vmatpush1.msra.mxu0 0.0
        %1305 = vmatprep.subr.mxu0 0.0
        %1306 = vmatpush1.msra.mxu0 0.0
        %1307 = vmatprep.subr.mxu0 0.0
        %1308 = vmatpush1.msra.mxu0 0.0
        %1309 = vmatprep.subr.mxu0 0.0
        %1310 = vmatpush1.msra.mxu0 0.0
        %1311 = vmatprep.subr.mxu0 0.0
        %1312 = vmatpush1.msra.mxu0 0.0
        %1313 = vmatprep.subr.mxu0 0.0
        %1314 = vmatpush1.msra.mxu0 0.0
        %1315 = vmatprep.subr.mxu0 0.0
        %1316 = vmatpush1.msra.mxu0 0.0
        %1317 = vmatprep.subr.mxu0 0.0
        %1318 = vmatpush1.msra.mxu0 0.0
        %1319 = vmatprep.subr.mxu0 0.0
        %1320 = vmatpush1.msra.mxu0 0.0
        %1321 = vmatprep.subr.mxu0 0.0
        %1322 = vmatpush1.msra.mxu0 0.0
        %1323 = vmatprep.subr.mxu0 0.0
        %1324 = vmatpush1.msra.mxu0 0.0
        %1325 = vmatprep.subr.mxu0 0.0
        %1326 = vmatpush1.msra.mxu0 0.0
        %1327 = vmatprep.subr.mxu0 0.0
        %1328 = vmatpush1.msra.mxu0 0.0
        %1329 = vmatprep.subr.mxu0 0.0
        %1330 = vmatpush1.msra.mxu0 0.0
        %1331 = vmatprep.subr.mxu0 0.0
        %1332 = vmatpush1.msra.mxu0 0.0
        %1333 = vmatprep.subr.mxu0 0.0
        %1334 = vmatpush1.msra.mxu0 0.0
        %1335 = vmatprep.subr.mxu0 0.0
        %1336 = vmatpush1.msra.mxu0 0.0
        %1337 = vmatprep.subr.mxu0 0.0
        %1338 = vmatpush1.msra.mxu0 0.0
        %1339 = vmatprep.subr.mxu0 0.0
        %1340 = vmatpush1.msra.mxu0 0.0
        %1341 = vmatprep.subr.mxu0 0.0
        %1342 = vmatpush1.msra.mxu0 0.0
        %1343 = vmatprep.subr.mxu0 0.0
        %1344 = vmatpush1.msra.mxu0 0.0
        %1345 = vmatprep.subr.mxu0 0.0
        %1346 = vmatpush1.msra.mxu0 0.0
        %1347 = vmatprep.subr.mxu0 0.0
        %1348 = vmatpush1.msra.mxu0 0.0
        %1349 = vmatprep.subr.mxu0 0.0
        %1350 = vmatpush1.msra.mxu0 0.0
        %1351 = vmatprep.subr.mxu0 0.0
        %1352 = vmatpush1.msra.mxu0 0.0
        %1353 = vmatprep.subr.mxu0 0.0
        %1354 = vmatpush1.msra.mxu0 0.0
        %1355 = vmatprep.subr.mxu0 0.0
        %1356 = vmatpush1.msra.mxu0 0.0
        %1357 = vmatprep.mubr.f32.mxu0 0.0
        %1358 = vmatmul.mubr.f32.gmra.mrb[0].mxu0 %v1291
        %v1359 = vpop.f32.mrb[0].mxu0
        %v1360 = vadd.f32 %v463, %v1359
        %v1361 = vpop.f32.mrb[0].mxu0
        %1362 = vdwg.mxu0
        %v1363 = vadd.f32 %v1275, %v1360
        %s1364 = scalar_lea.vmem %s335, 40 [#allocation11]
        %1365 = vst [vmem:[%s1364] sm:$0xff] %v1363
        %s1366 = scalar_lea.vmem %s295, 48 [#allocation3]
        %v1367 = vld [vmem:[%s1366] sm:$0xff]
        %1368 = vmatprep.subr.mxu0 0.0
        %1369 = vmatpush1.msra.mxu0 %v344
        %1370 = vmatprep.subr.mxu0 0.0
        %1371 = vmatpush1.msra.mxu0 %v345
        %1372 = vmatprep.subr.mxu0 0.0
        %1373 = vmatpush1.msra.mxu0 %v346
        %1374 = vmatprep.subr.mxu0 0.0
        %1375 = vmatpush1.msra.mxu0 %v347
        %1376 = vmatprep.subr.mxu0 0.0
        %1377 = vmatpush1.msra.mxu0 %v348
        %1378 = vmatprep.subr.mxu0 0.0
        %1379 = vmatpush1.msra.mxu0 %v349
        %1380 = vmatprep.subr.mxu0 0.0
        %1381 = vmatpush1.msra.mxu0 %v350
        %1382 = vmatprep.subr.mxu0 0.0
        %1383 = vmatpush1.msra.mxu0 %v351
        %1384 = vmatprep.subr.mxu0 0.0
        %1385 = vmatpush1.msra.mxu0 %v352
        %1386 = vmatprep.subr.mxu0 0.0
        %1387 = vmatpush1.msra.mxu0 %v353
        %1388 = vmatprep.subr.mxu0 0.0
        %1389 = vmatpush1.msra.mxu0 %v354
        %1390 = vmatprep.subr.mxu0 0.0
        %1391 = vmatpush1.msra.mxu0 %v355
        %1392 = vmatprep.subr.mxu0 0.0
        %1393 = vmatpush1.msra.mxu0 %v356
        %1394 = vmatprep.subr.mxu0 0.0
        %1395 = vmatpush1.msra.mxu0 %v357
        %1396 = vmatprep.subr.mxu0 0.0
        %1397 = vmatpush1.msra.mxu0 %v358
        %1398 = vmatprep.subr.mxu0 0.0
        %1399 = vmatpush1.msra.mxu0 %v359
        %1400 = vmatprep.subr.mxu0 0.0
        %1401 = vmatpush1.msra.mxu0 0.0
        %1402 = vmatprep.subr.mxu0 0.0
        %1403 = vmatpush1.msra.mxu0 0.0
        %1404 = vmatprep.subr.mxu0 0.0
        %1405 = vmatpush1.msra.mxu0 0.0
        %1406 = vmatprep.subr.mxu0 0.0
        %1407 = vmatpush1.msra.mxu0 0.0
        %1408 = vmatprep.subr.mxu0 0.0
        %1409 = vmatpush1.msra.mxu0 0.0
        %1410 = vmatprep.subr.mxu0 0.0
        %1411 = vmatpush1.msra.mxu0 0.0
        %1412 = vmatprep.subr.mxu0 0.0
        %1413 = vmatpush1.msra.mxu0 0.0
        %1414 = vmatprep.subr.mxu0 0.0
        %1415 = vmatpush1.msra.mxu0 0.0
        %1416 = vmatprep.subr.mxu0 0.0
        %1417 = vmatpush1.msra.mxu0 0.0
        %1418 = vmatprep.subr.mxu0 0.0
        %1419 = vmatpush1.msra.mxu0 0.0
        %1420 = vmatprep.subr.mxu0 0.0
        %1421 = vmatpush1.msra.mxu0 0.0
        %1422 = vmatprep.subr.mxu0 0.0
        %1423 = vmatpush1.msra.mxu0 0.0
        %1424 = vmatprep.subr.mxu0 0.0
        %1425 = vmatpush1.msra.mxu0 0.0
        %1426 = vmatprep.subr.mxu0 0.0
        %1427 = vmatpush1.msra.mxu0 0.0
        %1428 = vmatprep.subr.mxu0 0.0
        %1429 = vmatpush1.msra.mxu0 0.0
        %1430 = vmatprep.subr.mxu0 0.0
        %1431 = vmatpush1.msra.mxu0 0.0
        %1432 = vmatprep.mubr.f32.mxu0 0.0
        %1433 = vmatmul.mubr.f32.gmra.mrb[0].mxu0 %v1363
        %v1434 = vpop.f32.mrb[0].mxu0
        %v1435 = vadd.f32 0.0, %v1434
        %v1436 = vpop.f32.mrb[0].mxu0
        %1437 = vdwg.mxu0
        %v1438 = vadd.f32 %v1367, %v1435
        %v1439 = vtanh.pop %v1438
        %v1440 = vmul.f32 %v1439, %v442
        %v1441 = vxor.u32 %v1440, 2147483648
        %v1442 = vmul.f32 %v1441, 1.442695
        %v1443 = vpow.pop %v1442
        %v1444 = vadd.f32 %v1443, 1.0
        %v1445 = vrcp.pop %v1444
        %v1446 = vmul.f32 1.0, %v1445
        %1448 = vrot.lane.b32.xlu0 %v1446, 112
        %v1449 = vpop.permute.xlu0 %1448
        %v1451 = vadd.f32 %v1446, %v1449
        %v1452 = vmul.f32 %v1446, %v1449
        %v1453 = vmul.f32 %v1452, 2.0
        %v1454 = vsub.f32 %v1451, %v1453
        %v1456 = vsel %vm465, %v1454, 0
        %1458 = vmatprep.subr.mxu0 0.0
        %1459 = vmatpush1.msra.mxu0 %v360
        %1460 = vmatprep.subr.mxu0 0.0
        %1461 = vmatpush1.msra.mxu0 %v361
        %1462 = vmatprep.subr.mxu0 0.0
        %1463 = vmatpush1.msra.mxu0 0.0
        %1464 = vmatprep.subr.mxu0 0.0
        %1465 = vmatpush1.msra.mxu0 0.0
        %1466 = vmatprep.subr.mxu0 0.0
        %1467 = vmatpush1.msra.mxu0 0.0
        %1468 = vmatprep.subr.mxu0 0.0
        %1469 = vmatpush1.msra.mxu0 0.0
        %1470 = vmatprep.subr.mxu0 0.0
        %1471 = vmatpush1.msra.mxu0 0.0
        %1472 = vmatprep.subr.mxu0 0.0
        %1473 = vmatpush1.msra.mxu0 0.0
        %1474 = vmatprep.subr.mxu0 0.0
        %1475 = vmatpush1.msra.mxu0 0.0
        %1476 = vmatprep.subr.mxu0 0.0
        %1477 = vmatpush1.msra.mxu0 0.0
        %1478 = vmatprep.subr.mxu0 0.0
        %1479 = vmatpush1.msra.mxu0 0.0
        %1480 = vmatprep.subr.mxu0 0.0
        %1481 = vmatpush1.msra.mxu0 0.0
        %1482 = vmatprep.subr.mxu0 0.0
        %1483 = vmatpush1.msra.mxu0 0.0
        %1484 = vmatprep.subr.mxu0 0.0
        %1485 = vmatpush1.msra.mxu0 0.0
        %1486 = vmatprep.subr.mxu0 0.0
        %1487 = vmatpush1.msra.mxu0 0.0
        %1488 = vmatprep.subr.mxu0 0.0
        %1489 = vmatpush1.msra.mxu0 0.0
        %1490 = vmatprep.subr.mxu0 0.0
        %1491 = vmatpush1.msra.mxu0 0.0
        %1492 = vmatprep.subr.mxu0 0.0
        %1493 = vmatpush1.msra.mxu0 0.0
        %1494 = vmatprep.subr.mxu0 0.0
        %1495 = vmatpush1.msra.mxu0 0.0
        %1496 = vmatprep.subr.mxu0 0.0
        %1497 = vmatpush1.msra.mxu0 0.0
        %1498 = vmatprep.subr.mxu0 0.0
        %1499 = vmatpush1.msra.mxu0 0.0
        %1500 = vmatprep.subr.mxu0 0.0
        %1501 = vmatpush1.msra.mxu0 0.0
        %1502 = vmatprep.subr.mxu0 0.0
        %1503 = vmatpush1.msra.mxu0 0.0
        %1504 = vmatprep.subr.mxu0 0.0
        %1505 = vmatpush1.msra.mxu0 0.0
        %1506 = vmatprep.subr.mxu0 0.0
        %1507 = vmatpush1.msra.mxu0 0.0
        %1508 = vmatprep.subr.mxu0 0.0
        %1509 = vmatpush1.msra.mxu0 0.0
        %1510 = vmatprep.subr.mxu0 0.0
        %1511 = vmatpush1.msra.mxu0 0.0
        %1512 = vmatprep.subr.mxu0 0.0
        %1513 = vmatpush1.msra.mxu0 0.0
        %1514 = vmatprep.subr.mxu0 0.0
        %1515 = vmatpush1.msra.mxu0 0.0
        %1516 = vmatprep.subr.mxu0 0.0
        %1517 = vmatpush1.msra.mxu0 0.0
        %1518 = vmatprep.subr.mxu0 0.0
        %1519 = vmatpush1.msra.mxu0 0.0
        %1520 = vmatprep.subr.mxu0 0.0
        %1521 = vmatpush1.msra.mxu0 0.0
        %1522 = vmatprep.mubr.f32.mxu0 0.0
        %1523 = vmatmul.mubr.f32.gmra.mrb[0].mxu0 %v1456
        %v1524 = vpop.f32.mrb[0].mxu0
        %v1525 = vadd.f32 %v463, %v1524
        %v1526 = vpop.f32.mrb[0].mxu0
        %1527 = vdwg.mxu0
        %v1528 = vadd.f32 %v1440, %v1525
        %s1529 = scalar_lea.vmem %s335, 48 [#allocation11]
        %1530 = vst [vmem:[%s1529] sm:$0xff] %v1528
        %s1531 = scalar_lea.vmem %s295, 56 [#allocation3]
        %v1532 = vld [vmem:[%s1531] sm:$0xff]
        %1533 = vmatprep.subr.mxu0 0.0
        %1534 = vmatpush1.msra.mxu0 %v344
        %1535 = vmatprep.subr.mxu0 0.0
        %1536 = vmatpush1.msra.mxu0 %v345
        %1537 = vmatprep.subr.mxu0 0.0
        %1538 = vmatpush1.msra.mxu0 %v346
        %1539 = vmatprep.subr.mxu0 0.0
        %1540 = vmatpush1.msra.mxu0 %v347
        %1541 = vmatprep.subr.mxu0 0.0
        %1542 = vmatpush1.msra.mxu0 %v348
        %1543 = vmatprep.subr.mxu0 0.0
        %1544 = vmatpush1.msra.mxu0 %v349
        %1545 = vmatprep.subr.mxu0 0.0
        %1546 = vmatpush1.msra.mxu0 %v350
        %1547 = vmatprep.subr.mxu0 0.0
        %1548 = vmatpush1.msra.mxu0 %v351
        %1549 = vmatprep.subr.mxu0 0.0
        %1550 = vmatpush1.msra.mxu0 %v352
        %1551 = vmatprep.subr.mxu0 0.0
        %1552 = vmatpush1.msra.mxu0 %v353
        %1553 = vmatprep.subr.mxu0 0.0
        %1554 = vmatpush1.msra.mxu0 %v354
        %1555 = vmatprep.subr.mxu0 0.0
        %1556 = vmatpush1.msra.mxu0 %v355
        %1557 = vmatprep.subr.mxu0 0.0
        %1558 = vmatpush1.msra.mxu0 %v356
        %1559 = vmatprep.subr.mxu0 0.0
        %1560 = vmatpush1.msra.mxu0 %v357
        %1561 = vmatprep.subr.mxu0 0.0
        %1562 = vmatpush1.msra.mxu0 %v358
        %1563 = vmatprep.subr.mxu0 0.0
        %1564 = vmatpush1.msra.mxu0 %v359
        %1565 = vmatprep.subr.mxu0 0.0
        %1566 = vmatpush1.msra.mxu0 0.0
        %1567 = vmatprep.subr.mxu0 0.0
        %1568 = vmatpush1.msra.mxu0 0.0
        %1569 = vmatprep.subr.mxu0 0.0
        %1570 = vmatpush1.msra.mxu0 0.0
        %1571 = vmatprep.subr.mxu0 0.0
        %1572 = vmatpush1.msra.mxu0 0.0
        %1573 = vmatprep.subr.mxu0 0.0
        %1574 = vmatpush1.msra.mxu0 0.0
        %1575 = vmatprep.subr.mxu0 0.0
        %1576 = vmatpush1.msra.mxu0 0.0
        %1577 = vmatprep.subr.mxu0 0.0
        %1578 = vmatpush1.msra.mxu0 0.0
        %1579 = vmatprep.subr.mxu0 0.0
        %1580 = vmatpush1.msra.mxu0 0.0
        %1581 = vmatprep.subr.mxu0 0.0
        %1582 = vmatpush1.msra.mxu0 0.0
        %1583 = vmatprep.subr.mxu0 0.0
        %1584 = vmatpush1.msra.mxu0 0.0
        %1585 = vmatprep.subr.mxu0 0.0
        %1586 = vmatpush1.msra.mxu0 0.0
        %1587 = vmatprep.subr.mxu0 0.0
        %1588 = vmatpush1.msra.mxu0 0.0
        %1589 = vmatprep.subr.mxu0 0.0
        %1590 = vmatpush1.msra.mxu0 0.0
        %1591 = vmatprep.subr.mxu0 0.0
        %1592 = vmatpush1.msra.mxu0 0.0
        %1593 = vmatprep.subr.mxu0 0.0
        %1594 = vmatpush1.msra.mxu0 0.0
        %1595 = vmatprep.subr.mxu0 0.0
        %1596 = vmatpush1.msra.mxu0 0.0
        %1597 = vmatprep.mubr.f32.mxu0 0.0
        %1598 = vmatmul.mubr.f32.gmra.mrb[0].mxu0 %v1528
        %v1599 = vpop.f32.mrb[0].mxu0
        %v1600 = vadd.f32 0.0, %v1599
        %v1601 = vpop.f32.mrb[0].mxu0
        %1602 = vdwg.mxu0
        %v1603 = vadd.f32 %v1532, %v1600
        %v1604 = vtanh.pop %v1603
        %v1605 = vmul.f32 %v1604, %v442
        %v1606 = vxor.u32 %v1605, 2147483648
        %v1607 = vmul.f32 %v1606, 1.442695
        %v1608 = vpow.pop %v1607
        %v1609 = vadd.f32 %v1608, 1.0
        %v1610 = vrcp.pop %v1609
        %v1611 = vmul.f32 1.0, %v1610
        %1613 = vrot.lane.b32.xlu0 %v1611, 112
        %v1614 = vpop.permute.xlu0 %1613
        %v1616 = vadd.f32 %v1611, %v1614
        %v1617 = vmul.f32 %v1611, %v1614
        %v1618 = vmul.f32 %v1617, 2.0
        %v1619 = vsub.f32 %v1616, %v1618
        %v1621 = vsel %vm465, %v1619, 0
        %1623 = vmatprep.subr.mxu0 0.0
        %1624 = vmatpush1.msra.mxu0 %v360
        %1625 = vmatprep.subr.mxu0 0.0
        %1626 = vmatpush1.msra.mxu0 %v361
        %1627 = vmatprep.subr.mxu0 0.0
        %1628 = vmatpush1.msra.mxu0 0.0
        %1629 = vmatprep.subr.mxu0 0.0
        %1630 = vmatpush1.msra.mxu0 0.0
        %1631 = vmatprep.subr.mxu0 0.0
        %1632 = vmatpush1.msra.mxu0 0.0
        %1633 = vmatprep.subr.mxu0 0.0
        %1634 = vmatpush1.msra.mxu0 0.0
        %1635 = vmatprep.subr.mxu0 0.0
        %1636 = vmatpush1.msra.mxu0 0.0
        %1637 = vmatprep.subr.mxu0 0.0
        %1638 = vmatpush1.msra.mxu0 0.0
        %1639 = vmatprep.subr.mxu0 0.0
        %1640 = vmatpush1.msra.mxu0 0.0
        %1641 = vmatprep.subr.mxu0 0.0
        %1642 = vmatpush1.msra.mxu0 0.0
        %1643 = vmatprep.subr.mxu0 0.0
        %1644 = vmatpush1.msra.mxu0 0.0
        %1645 = vmatprep.subr.mxu0 0.0
        %1646 = vmatpush1.msra.mxu0 0.0
        %1647 = vmatprep.subr.mxu0 0.0
        %1648 = vmatpush1.msra.mxu0 0.0
        %1649 = vmatprep.subr.mxu0 0.0
        %1650 = vmatpush1.msra.mxu0 0.0
        %1651 = vmatprep.subr.mxu0 0.0
        %1652 = vmatpush1.msra.mxu0 0.0
        %1653 = vmatprep.subr.mxu0 0.0
        %1654 = vmatpush1.msra.mxu0 0.0
        %1655 = vmatprep.subr.mxu0 0.0
        %1656 = vmatpush1.msra.mxu0 0.0
        %1657 = vmatprep.subr.mxu0 0.0
        %1658 = vmatpush1.msra.mxu0 0.0
        %1659 = vmatprep.subr.mxu0 0.0
        %1660 = vmatpush1.msra.mxu0 0.0
        %1661 = vmatprep.subr.mxu0 0.0
        %1662 = vmatpush1.msra.mxu0 0.0
        %1663 = vmatprep.subr.mxu0 0.0
        %1664 = vmatpush1.msra.mxu0 0.0
        %1665 = vmatprep.subr.mxu0 0.0
        %1666 = vmatpush1.msra.mxu0 0.0
        %1667 = vmatprep.subr.mxu0 0.0
        %1668 = vmatpush1.msra.mxu0 0.0
        %1669 = vmatprep.subr.mxu0 0.0
        %1670 = vmatpush1.msra.mxu0 0.0
        %1671 = vmatprep.subr.mxu0 0.0
        %1672 = vmatpush1.msra.mxu0 0.0
        %1673 = vmatprep.subr.mxu0 0.0
        %1674 = vmatpush1.msra.mxu0 0.0
        %1675 = vmatprep.subr.mxu0 0.0
        %1676 = vmatpush1.msra.mxu0 0.0
        %1677 = vmatprep.subr.mxu0 0.0
        %1678 = vmatpush1.msra.mxu0 0.0
        %1679 = vmatprep.subr.mxu0 0.0
        %1680 = vmatpush1.msra.mxu0 0.0
        %1681 = vmatprep.subr.mxu0 0.0
        %1682 = vmatpush1.msra.mxu0 0.0
        %1683 = vmatprep.subr.mxu0 0.0
        %1684 = vmatpush1.msra.mxu0 0.0
        %1685 = vmatprep.subr.mxu0 0.0
        %1686 = vmatpush1.msra.mxu0 0.0
        %1687 = vmatprep.mubr.f32.mxu0 0.0
        %1688 = vmatmul.mubr.f32.gmra.mrb[0].mxu0 %v1621
        %v1689 = vpop.f32.mrb[0].mxu0
        %v1690 = vadd.f32 %v463, %v1689
        %v1691 = vpop.f32.mrb[0].mxu0
        %1692 = vdwg.mxu0
        %v1693 = vadd.f32 %v1605, %v1690
        %s1694 = scalar_lea.vmem %s335, 56 [#allocation11]
        %1695 = vst [vmem:[%s1694] sm:$0xff] %v1693
        %1696 = vst [vmem:[#allocation2] sm:$0xff] %v1693
        %s1697 = sand.u32 %s185, 1
        %s1698 = scalar_lea.sflag [#allocation5], %s1697
        %s1699 = sand.u32 %s185, 1
        %s1700 = smul.addr %s1699, 64
        %s1701 = scalar_lea.vmem [#allocation11], %s1700
        // Predicated region
        $region65: #{tpu_custom_call.1} parent=43 // pred_check
          %p1702 = pneg %p195
        $region66: #{tpu_custom_call.1} parent=43 // pred_check_branch
          %1704 = sbr.rel (%p1702) target = $region68
        $region67: #{tpu_custom_call.1} parent=43 // pred_region
          %s1705 = smul.u32 8, %s30
          %s1707 = ssub.s32 1024, 1024
          %1708 = vsyncadd %s1698, %s1707
          %s1709 = sadd.s32 %s29, %s1705
          %s1710 = smul.addr %s1709, 128
          %s1711 = scalar_lea.hbm %s6, %s1710
          %s1712 = sshll.u32 %s1701, 4
          %s1713 = int_to_ptr.vmem [resolvable:$true] %s1712
          %1718 = dma.vmem_to_hbm [thread:$0]  %s1713, 1024, %s1711, %s1698, 128, 128, 8
        $region68: #{tpu_custom_call.1} parent=43 // pred_fallthru
          _
      $region44: #{tpu_custom_call.1} parent=5 // pred_fallthru
        _
      %p1719 = scmp.le.s32.totalorder 2, %s20
      // Predicated region
      $region69: #{tpu_custom_call.1} parent=5 // pred_check
        %p1720 = pneg %p1719
      $region70: #{tpu_custom_call.1} parent=5 // pred_check_branch
        %1722 = sbr.rel (%p1720) target = $region72
      $region71: #{tpu_custom_call.1} parent=5 // pred_region
        %s1723 = ssub.s32 %s20, 2
        // Predicated region
        $region73: #{tpu_custom_call.1} parent=71 // pred_check
          %p1724 = pneg %p201
        $region74: #{tpu_custom_call.1} parent=71 // pred_check_branch
          %1726 = sbr.rel (%p1724) target = $region76
        $region75: #{tpu_custom_call.1} parent=71 // pred_region
          %s1727 = sand.u32 %s186, 1
          %s1728 = scalar_lea.sflag [#allocation5], %s1727
          %s1729 = sand.u32 %s186, 1
          %s1730 = smul.addr %s1729, 64
          %s1731 = scalar_lea.vmem [#allocation11], %s1730
          %1732 = dma.done %s1728, 1024
        $region76: #{tpu_custom_call.1} parent=71 // pred_fallthru
          _
      $region72: #{tpu_custom_call.1} parent=5 // pred_fallthru
        _
    $region6: #{tpu_custom_call.1} parent=1 // loop_footer
      %s24 = sadd.s32 1, %s20
    $region7: #{tpu_custom_call.1} parent=1 // loop_footer_branch
      %19 = sbr.rel target = $region3
    $region8: #{tpu_custom_call.1} parent=1 // loop_exit
      _
    %1733 = vsyncpa [#allocation4], 1
    %s1734 = scalar_lea.sflag [#allocation4], 1
    %1735 = vsyncpa %s1734, 1
    %1736 = vsyncpa [#allocation7], 1
    %1737 = vsyncpa [#allocation10], 1
    %1738 = vsyncpa [#allocation5], 1
    %s1739 = scalar_lea.sflag [#allocation5], 1
    %1740 = vsyncpa %s1739, 1

</llo_original>
